<compile_context>
chip_gen: v5e
topology: v5e:2x2
jax: 0.10.0
libtpu: 0.0.40
codegen_flags: <defaults>
</compile_context>

<pallas_src>
import jax
import jax.numpy as jnp
from jax.experimental import pallas as pl
from jax.experimental.pallas import tpu as pltpu

B = 8              # batch (sublane-aligned)
DIM1 = 32          # dim1 (scale_dim1 == 1)
DIM2 = 32          # dim2 (scale_dim2 == 1)
DP1 = DIM1 + 1     # 33 (with the appended ones column, only used at pack time)
DP2 = DIM2 + 1     # 33
PQ = DIM1 * DIM2   # 1024
MMHID = 64

# Static row offsets inside the packed weight slab (all multiples of 8).
OFF_WZ = 0                         # wz12      (1024, 64)
OFF_WH1 = OFF_WZ + PQ              # wh1_wide  (  32, 64)
OFF_WH2 = OFF_WH1 + DIM1           # wh2_wide  (  32, 64)
OFF_WO = OFF_WH2 + DIM2            # wo_blkdiag(  64, 64)
OFF_WE1C = OFF_WO + DIM1 + DIM2    # we1_core  (1024, 64)
OFF_WE1RC = OFF_WE1C + PQ          # we1_rowcol(  64, 64)
OFF_WE2 = OFF_WE1RC + DIM1 + DIM2  # we2_packed( 128, 64)
W_ROWS = OFF_WE2 + MMHID + DIM1 + DIM2   # 2368


# ---------------------------------------------------------------------------
# Single fused, gridless kernel: gates -> outer products -> enc1 -> skip -> enc2
# ---------------------------------------------------------------------------
def _bilinear_fusion_kernel(v1_ref, v2_ref, w_ref, b_ref, et_ref, out_ref):
    def mm(x, w):
        return jnp.dot(x, w, preferred_element_type=jnp.float32)

    v1 = v1_ref[...]                                   # (8, 32)
    v2 = v2_ref[...]                                   # (8, 32)
    E = et_ref[0:DIM1, :]                              # (32, 1024) expand matrix
    T = et_ref[DIM1:2 * DIM1, :]                       # (32, 1024) tile matrix

    # --- gated bilinear branches, fused 1|2 across 64 output lanes ----------
    # Shared outer product u[b, p*32+q] = v1[b,p] * v2[b,q], built on the MXU.
    u = mm(v1, E) * mm(v2, T)                          # (8, 1024)
    z12 = mm(u, w_ref[OFF_WZ:OFF_WZ + PQ, :]) + b_ref[1:2, :]              # (8, 64)
    h12 = jnp.maximum(mm(v1, w_ref[OFF_WH1:OFF_WH1 + DIM1, :])
                      + mm(v2, w_ref[OFF_WH2:OFF_WH2 + DIM2, :])
                      + b_ref[0:1, :], 0.0)            # (8, 64) = [h1 | h2]
    g12 = jax.nn.sigmoid(z12) * h12
    # TODO(synk): Dropout(p=0.25) layers are identity at inference; not modeled.
    o12 = jnp.maximum(mm(g12, w_ref[OFF_WO:OFF_WO + DIM1 + DIM2, :])
                      + b_ref[2:3, :], 0.0)            # (8, 64) = [o1 | o2]

    # --- (o1,1) ⊗ (o2,1) with the constant terms folded into biases ---------
    o1 = o12[:, :DIM1]                                 # (8, 32)
    o2 = o12[:, DIM1:]                                 # (8, 32)
    m = mm(o1, E) * mm(o2, T)                          # (8, 1024)

    # --- encoder1 + ReLU (ones row/col handled by we1_rowcol / bias) --------
    out1 = jnp.maximum(mm(m, w_ref[OFF_WE1C:OFF_WE1C + PQ, :])
                       + mm(o12, w_ref[OFF_WE1RC:OFF_WE1RC + DIM1 + DIM2, :])
                       + b_ref[3:4, :], 0.0)           # (8, 64)

    # --- skip concat is exactly [out1 | o1 | o2] = 128 lanes -> one matmul --
    s = jnp.concatenate([out1, o12], axis=1)           # (8, 128)
    out_ref[...] = jnp.maximum(
        mm(s, w_ref[OFF_WE2:OFF_WE2 + MMHID + DIM1 + DIM2, :]) + b_ref[4:5, :],
        0.0)                                           # encoder2 + ReLU


def bilinear_fusion(v1, v2, packed):
    args = (v1, v2, packed['w_slab'], packed['b_slab'], packed['et_slab'])
    vmem = pltpu.MemorySpace.VMEM
    return pl.pallas_call(
        _bilinear_fusion_kernel,
        out_shape=jax.ShapeDtypeStruct((B, MMHID), jnp.float32),
        in_specs=[pl.BlockSpec(memory_space=vmem) for _ in args],
        out_specs=pl.BlockSpec(memory_space=vmem),
    )(*args)


# ---------------------------------------------------------------------------
# One-time parameter repacking (done at load time, NOT per call)
# ---------------------------------------------------------------------------
def pack_params(p):
    f32 = jnp.float32
    Z = jnp.zeros((DIM1, DIM2), f32)

    # 0/1 expand / tile matrices:
    #   (x @ E)[b, p*32+q] = x[b, p]     (x @ T)[b, p*32+q] = x[b, q]
    pq = jnp.arange(PQ)[None, :]
    r = jnp.arange(DIM1)[:, None]
    E = (pq // DIM2 == r).astype(f32)                          # (32, 1024)
    T = (pq % DIM2 == r).astype(f32)                           # (32, 1024)
    et_slab = jnp.concatenate([E, T], axis=0)                  # (64, 1024)

    # Bilinear weights W[o,p,q] -> flat (p*32+q, o); both branches side by side.
    wz1 = jnp.transpose(p['wz1'], (1, 2, 0)).reshape(PQ, DIM1)
    wz2 = jnp.transpose(p['wz2'], (1, 2, 0)).reshape(PQ, DIM2)
    wz12 = jnp.concatenate([wz1, wz2], axis=1)                 # (1024, 64)

    wh1w = jnp.concatenate([p['wh1'], Z], axis=1)              # (32, 64) [Wh1 | 0]
    wh2w = jnp.concatenate([Z, p['wh2']], axis=1)              # (32, 64) [0 | Wh2]
    wo_blk = jnp.concatenate(
        [jnp.concatenate([p['wo1'], Z], axis=1),
         jnp.concatenate([Z, p['wo2']], axis=1)], axis=0)      # (64, 64)

    # encoder1 (1089 = 33*33 input rows, index j*33+k): split into the 1024
    # o1[j]*o2[k] rows, the 32 "k=32" rows (× o1), the 32 "j=32" rows (× o2),
    # and the constant (j=32,k=32) row folded into the bias.
    we1 = p['we1']                                             # (1089, 64)
    we1_jk = we1[:DIM1 * DP2].reshape(DIM1, DP2, MMHID)
    we1_core = we1_jk[:, :DIM2, :].reshape(PQ, MMHID)          # (1024, 64)
    we1_row = we1_jk[:, DIM2, :]                               # (32, 64)
    we1_col = we1[DIM1 * DP2:DIM1 * DP2 + DIM2]                # (32, 64)
    we1_rc = jnp.concatenate([we1_row, we1_col], axis=0)       # (64, 64)
    be1f = p['be1'] + we1[DIM1 * DP2 + DIM2][None, :]          # (1, 64)

    # encoder2 (130 = 64 + 33 + 33 rows): fold the two "ones" rows into bias.
    we2 = p['we2']                                             # (130, 64)
    we2_pk = jnp.concatenate(
        [we2[:MMHID],                                          # × out1
         we2[MMHID:MMHID + DIM1],                              # × o1
         we2[MMHID + DP1:MMHID + DP1 + DIM2]], axis=0)         # × o2 -> (128, 64)
    be2f = (p['be2'] + we2[MMHID + DIM1][None, :]
            + we2[MMHID + DP1 + DIM2][None, :])                # (1, 64)

    w_slab = jnp.concatenate(
        [wz12, wh1w, wh2w, wo_blk, we1_core, we1_rc, we2_pk], axis=0)
    assert w_slab.shape == (W_ROWS, MMHID), w_slab.shape

    b_slab = jnp.concatenate(
        [jnp.concatenate([p['bh1'], p['bh2']], axis=1),        # row 0: bh12
         jnp.concatenate([p['bz1'], p['bz2']], axis=1),        # row 1: bz12
         jnp.concatenate([p['bo1'], p['bo2']], axis=1),        # row 2: bo12
         be1f,                                                 # row 3
         be2f], axis=0)                                        # row 4 -> (5, 64)

    return {'w_slab': w_slab, 'b_slab': b_slab, 'et_slab': et_slab}


# ---------------------------------------------------------------------------
# Parameter init (deterministic, mirrors module shapes) and pure-JAX reference
# ---------------------------------------------------------------------------
def make_params(key):
    ks = iter(jax.random.split(key, 24))

    def nrm(shape, fan_in, scale=1.0):
        return jax.random.normal(next(ks), shape, jnp.float32) * (scale / (fan_in ** 0.5))

    p = {}
    p['wh1'] = nrm((DIM1, DIM1), DIM1)                 # linear_h1 (in,out)
    p['bh1'] = nrm((1, DIM1), DIM1, 0.1)
    p['wz1'] = nrm((DIM1, DIM1, DIM2), DIM1)           # bilinear1 weight (out,in1,in2)
    p['bz1'] = nrm((1, DIM1), DIM1, 0.1)
    p['wo1'] = nrm((DIM1, DIM1), DIM1)                 # linear_o1 (in,out)
    p['bo1'] = nrm((1, DIM1), DIM1, 0.1)
    p['wh2'] = nrm((DIM2, DIM2), DIM2)
    p['bh2'] = nrm((1, DIM2), DIM2, 0.1)
    p['wz2'] = nrm((DIM2, DIM1, DIM2), DIM2)           # bilinear2 weight (out,in1,in2)
    p['bz2'] = nrm((1, DIM2), DIM2, 0.1)
    p['wo2'] = nrm((DIM2, DIM2), DIM2)
    p['bo2'] = nrm((1, DIM2), DIM2, 0.1)
    p['we1'] = nrm((DP1 * DP2, MMHID), DP1 * DP2)      # encoder1 (1089, 64)
    p['be1'] = nrm((1, MMHID), MMHID, 0.1)
    p['we2'] = nrm((MMHID + DP1 + DP2, MMHID), MMHID + DP1 + DP2)  # encoder2 (130, 64)
    p['be2'] = nrm((1, MMHID), MMHID, 0.1)
    return p


def reference(v1, v2, p):
    def bil(x, y, w, b):
        return jnp.einsum('bp,opq,bq->bo', x, w, y) + b

    h1 = jax.nn.relu(v1 @ p['wh1'] + p['bh1'])
    o1 = jax.nn.relu((jax.nn.sigmoid(bil(v1, v2, p['wz1'], p['bz1'])) * h1) @ p['wo1'] + p['bo1'])
    h2 = jax.nn.relu(v2 @ p['wh2'] + p['bh2'])
    o2 = jax.nn.relu((jax.nn.sigmoid(bil(v1, v2, p['wz2'], p['bz2'])) * h2) @ p['wo2'] + p['bo2'])
    ones = jnp.ones((B, 1), jnp.float32)
    o1p = jnp.concatenate([o1, ones], 1)
    o2p = jnp.concatenate([o2, ones], 1)
    o12 = (o1p[:, :, None] * o2p[:, None, :]).reshape(B, -1)
    out1 = jax.nn.relu(o12 @ p['we1'] + p['be1'])
    h = jnp.concatenate([out1, o1p, o2p], 1)
    return jax.nn.relu(h @ p['we2'] + p['be2'])


if __name__ == "__main__":
    key = jax.random.PRNGKey(0)
    kp, k1, k2 = jax.random.split(key, 3)
    params = make_params(kp)
    packed = pack_params(params)       # one-time repack (parameter-load time)
    vec1 = jax.random.normal(k1, (B, DIM1), jnp.float32)
    vec2 = jax.random.normal(k2, (B, DIM2), jnp.float32)

    out = bilinear_fusion(vec1, vec2, packed)
    out = jax.block_until_ready(out)

    ref = reference(vec1, vec2, params)
    assert out.shape == (B, MMHID), out.shape
    max_err = float(jnp.max(jnp.abs(out - ref)))
    assert bool(jnp.allclose(out, ref, rtol=2e-3, atol=2e-3)), f"max_err={max_err}"
    print("KERNEL_OK")
</pallas_src>

<mosaic_0001>
module attributes {stable_mosaic.version = 11 : i64} {
  func.func @_bilinear_fusion_kernel(%arg0: memref<8x32xf32, #tpu.memory_space<vmem>>, %arg1: memref<8x32xf32, #tpu.memory_space<vmem>>, %arg2: memref<2368x64xf32, #tpu.memory_space<vmem>>, %arg3: memref<5x64xf32, #tpu.memory_space<vmem>>, %arg4: memref<64x1024xf32, #tpu.memory_space<vmem>>, %arg5: memref<8x64xf32, #tpu.memory_space<vmem>>) attributes {dimension_semantics = [], scalar_prefetch = 0 : i64, scratch_operands = 0 : i64, tpu.core_type = #tpu.core_type<tc>} {
    %c0 = arith.constant 0 : index
    %c0_0 = arith.constant 0 : index
    %0 = vector.load %arg0[%c0, %c0_0] : memref<8x32xf32, #tpu.memory_space<vmem>>, vector<8x32xf32>
    %c0_1 = arith.constant 0 : index
    %c0_2 = arith.constant 0 : index
    %1 = vector.load %arg1[%c0_1, %c0_2] : memref<8x32xf32, #tpu.memory_space<vmem>>, vector<8x32xf32>
    %c0_3 = arith.constant 0 : index
    %c0_4 = arith.constant 0 : index
    %2 = vector.load %arg4[%c0_3, %c0_4] : memref<64x1024xf32, #tpu.memory_space<vmem>>, vector<32x1024xf32>
    %c32 = arith.constant 32 : index
    %c0_5 = arith.constant 0 : index
    %3 = vector.load %arg4[%c32, %c0_5] : memref<64x1024xf32, #tpu.memory_space<vmem>>, vector<32x1024xf32>
    %cst = arith.constant dense<0.000000e+00> : vector<8x1024xf32>
    %4 = tpu.matmul %0, %2, %cst {dimension_numbers = #tpu.dot_dimension_numbers<[1], [0], [0], [1], [0, 0, 1, 1], [], []>} : vector<8x32xf32>, vector<32x1024xf32>, vector<8x1024xf32> -> vector<8x1024xf32>
    %cst_6 = arith.constant dense<0.000000e+00> : vector<8x1024xf32>
    %5 = tpu.matmul %1, %3, %cst_6 {dimension_numbers = #tpu.dot_dimension_numbers<[1], [0], [0], [1], [0, 0, 1, 1], [], []>} : vector<8x32xf32>, vector<32x1024xf32>, vector<8x1024xf32> -> vector<8x1024xf32>
    %6 = arith.mulf %4, %5 : vector<8x1024xf32>
    %c0_7 = arith.constant 0 : index
    %c0_8 = arith.constant 0 : index
    %7 = vector.load %arg2[%c0_7, %c0_8] : memref<2368x64xf32, #tpu.memory_space<vmem>>, vector<1024x64xf32>
    %cst_9 = arith.constant dense<0.000000e+00> : vector<8x64xf32>
    %8 = tpu.matmul %6, %7, %cst_9 {dimension_numbers = #tpu.dot_dimension_numbers<[1], [0], [0], [1], [0, 0, 1, 1], [], []>} : vector<8x1024xf32>, vector<1024x64xf32>, vector<8x64xf32> -> vector<8x64xf32>
    %c1 = arith.constant 1 : index
    %c0_10 = arith.constant 0 : index
    %9 = vector.load %arg3[%c1, %c0_10] : memref<5x64xf32, #tpu.memory_space<vmem>>, vector<1x64xf32>
    %10 = vector.broadcast %9 : vector<1x64xf32> to vector<8x64xf32>
    %11 = arith.addf %8, %10 : vector<8x64xf32>
    %c1024 = arith.constant 1024 : index
    %c0_11 = arith.constant 0 : index
    %12 = vector.load %arg2[%c1024, %c0_11] : memref<2368x64xf32, #tpu.memory_space<vmem>>, vector<32x64xf32>
    %cst_12 = arith.constant dense<0.000000e+00> : vector<8x64xf32>
    %13 = tpu.matmul %0, %12, %cst_12 {dimension_numbers = #tpu.dot_dimension_numbers<[1], [0], [0], [1], [0, 0, 1, 1], [], []>} : vector<8x32xf32>, vector<32x64xf32>, vector<8x64xf32> -> vector<8x64xf32>
    %c1056 = arith.constant 1056 : index
    %c0_13 = arith.constant 0 : index
    %14 = vector.load %arg2[%c1056, %c0_13] : memref<2368x64xf32, #tpu.memory_space<vmem>>, vector<32x64xf32>
    %cst_14 = arith.constant dense<0.000000e+00> : vector<8x64xf32>
    %15 = tpu.matmul %1, %14, %cst_14 {dimension_numbers = #tpu.dot_dimension_numbers<[1], [0], [0], [1], [0, 0, 1, 1], [], []>} : vector<8x32xf32>, vector<32x64xf32>, vector<8x64xf32> -> vector<8x64xf32>
    %16 = arith.addf %13, %15 : vector<8x64xf32>
    %c0_15 = arith.constant 0 : index
    %c0_16 = arith.constant 0 : index
    %17 = vector.load %arg3[%c0_15, %c0_16] : memref<5x64xf32, #tpu.memory_space<vmem>>, vector<1x64xf32>
    %18 = vector.broadcast %17 : vector<1x64xf32> to vector<8x64xf32>
    %19 = arith.addf %16, %18 : vector<8x64xf32>
    %cst_17 = arith.constant 0.000000e+00 : f32
    %20 = vector.broadcast %cst_17 : f32 to vector<8x64xf32>
    %21 = arith.maximumf %19, %20 : vector<8x64xf32>
    %22 = arith.negf %11 : vector<8x64xf32>
    %23 = math.exp %22 : vector<8x64xf32>
    %cst_18 = arith.constant 1.000000e+00 : f32
    %24 = vector.broadcast %cst_18 : f32 to vector<8x64xf32>
    %25 = arith.addf %24, %23 : vector<8x64xf32>
    %26 = arith.divf %24, %25 : vector<8x64xf32>
    %27 = arith.mulf %26, %21 : vector<8x64xf32>
    %c1088 = arith.constant 1088 : index
    %c0_19 = arith.constant 0 : index
    %28 = vector.load %arg2[%c1088, %c0_19] : memref<2368x64xf32, #tpu.memory_space<vmem>>, vector<64x64xf32>
    %cst_20 = arith.constant dense<0.000000e+00> : vector<8x64xf32>
    %29 = tpu.matmul %27, %28, %cst_20 {dimension_numbers = #tpu.dot_dimension_numbers<[1], [0], [0], [1], [0, 0, 1, 1], [], []>} : vector<8x64xf32>, vector<64x64xf32>, vector<8x64xf32> -> vector<8x64xf32>
    %c2 = arith.constant 2 : index
    %c0_21 = arith.constant 0 : index
    %30 = vector.load %arg3[%c2, %c0_21] : memref<5x64xf32, #tpu.memory_space<vmem>>, vector<1x64xf32>
    %31 = vector.broadcast %30 : vector<1x64xf32> to vector<8x64xf32>
    %32 = arith.addf %29, %31 : vector<8x64xf32>
    %cst_22 = arith.constant 0.000000e+00 : f32
    %33 = vector.broadcast %cst_22 : f32 to vector<8x64xf32>
    %34 = arith.maximumf %32, %33 : vector<8x64xf32>
    %35 = vector.extract_strided_slice %34 {offsets = [0, 0], sizes = [8, 32], strides = [1, 1]} : vector<8x64xf32> to vector<8x32xf32>
    %36 = vector.extract_strided_slice %34 {offsets = [0, 32], sizes = [8, 32], strides = [1, 1]} : vector<8x64xf32> to vector<8x32xf32>
    %cst_23 = arith.constant dense<0.000000e+00> : vector<8x1024xf32>
    %37 = tpu.matmul %35, %2, %cst_23 {dimension_numbers = #tpu.dot_dimension_numbers<[1], [0], [0], [1], [0, 0, 1, 1], [], []>} : vector<8x32xf32>, vector<32x1024xf32>, vector<8x1024xf32> -> vector<8x1024xf32>
    %cst_24 = arith.constant dense<0.000000e+00> : vector<8x1024xf32>
    %38 = tpu.matmul %36, %3, %cst_24 {dimension_numbers = #tpu.dot_dimension_numbers<[1], [0], [0], [1], [0, 0, 1, 1], [], []>} : vector<8x32xf32>, vector<32x1024xf32>, vector<8x1024xf32> -> vector<8x1024xf32>
    %39 = arith.mulf %37, %38 : vector<8x1024xf32>
    %c1152 = arith.constant 1152 : index
    %c0_25 = arith.constant 0 : index
    %40 = vector.load %arg2[%c1152, %c0_25] : memref<2368x64xf32, #tpu.memory_space<vmem>>, vector<1024x64xf32>
    %cst_26 = arith.constant dense<0.000000e+00> : vector<8x64xf32>
    %41 = tpu.matmul %39, %40, %cst_26 {dimension_numbers = #tpu.dot_dimension_numbers<[1], [0], [0], [1], [0, 0, 1, 1], [], []>} : vector<8x1024xf32>, vector<1024x64xf32>, vector<8x64xf32> -> vector<8x64xf32>
    %c2176 = arith.constant 2176 : index
    %c0_27 = arith.constant 0 : index
    %42 = vector.load %arg2[%c2176, %c0_27] : memref<2368x64xf32, #tpu.memory_space<vmem>>, vector<64x64xf32>
    %cst_28 = arith.constant dense<0.000000e+00> : vector<8x64xf32>
    %43 = tpu.matmul %34, %42, %cst_28 {dimension_numbers = #tpu.dot_dimension_numbers<[1], [0], [0], [1], [0, 0, 1, 1], [], []>} : vector<8x64xf32>, vector<64x64xf32>, vector<8x64xf32> -> vector<8x64xf32>
    %44 = arith.addf %41, %43 : vector<8x64xf32>
    %c3 = arith.constant 3 : index
    %c0_29 = arith.constant 0 : index
    %45 = vector.load %arg3[%c3, %c0_29] : memref<5x64xf32, #tpu.memory_space<vmem>>, vector<1x64xf32>
    %46 = vector.broadcast %45 : vector<1x64xf32> to vector<8x64xf32>
    %47 = arith.addf %44, %46 : vector<8x64xf32>
    %cst_30 = arith.constant 0.000000e+00 : f32
    %48 = vector.broadcast %cst_30 : f32 to vector<8x64xf32>
    %49 = arith.maximumf %47, %48 : vector<8x64xf32>
    %50 = tpu.concatenate %49, %34 in 1 : vector<8x64xf32>, vector<8x64xf32> -> vector<8x128xf32>
    %c2240 = arith.constant 2240 : index
    %c0_31 = arith.constant 0 : index
    %51 = vector.load %arg2[%c2240, %c0_31] : memref<2368x64xf32, #tpu.memory_space<vmem>>, vector<128x64xf32>
    %cst_32 = arith.constant dense<0.000000e+00> : vector<8x64xf32>
    %52 = tpu.matmul %50, %51, %cst_32 {dimension_numbers = #tpu.dot_dimension_numbers<[1], [0], [0], [1], [0, 0, 1, 1], [], []>} : vector<8x128xf32>, vector<128x64xf32>, vector<8x64xf32> -> vector<8x64xf32>
    %c4 = arith.constant 4 : index
    %c0_33 = arith.constant 0 : index
    %53 = vector.load %arg3[%c4, %c0_33] : memref<5x64xf32, #tpu.memory_space<vmem>>, vector<1x64xf32>
    %54 = vector.broadcast %53 : vector<1x64xf32> to vector<8x64xf32>
    %55 = arith.addf %52, %54 : vector<8x64xf32>
    %cst_34 = arith.constant 0.000000e+00 : f32
    %56 = vector.broadcast %cst_34 : f32 to vector<8x64xf32>
    %57 = arith.maximumf %55, %56 : vector<8x64xf32>
    %c0_35 = arith.constant 0 : index
    %c0_36 = arith.constant 0 : index
    %58 = vector.load %arg5[%c0_35, %c0_36] : memref<8x64xf32, #tpu.memory_space<vmem>>, vector<8x64xf32>
    tpu.vector_store %arg5[%c0_35, %c0_36], %57 {strides = array<i32>} : memref<8x64xf32, #tpu.memory_space<vmem>>, vector<8x64xf32>,
    return
  }
}

</mosaic_0001>

<llo_original>
// kernel: tpu_custom_call.1
$region0: #{tpu_custom_call.1}
  #allocation0 [shape = 'u32[]', space=smem, size = 0x4, offset = 0x4, fixed_abs, tag = 'smem constant byte address 0x4 - core index']
  #allocation1 [shape = 'u32[72,128]{1,0:T(1,128)}', space=vmem, size = 0x9000, scoped, tag = 'internal scratch']
  %s0 = inlined_call_operand.vmem [shape: f32[8,32], index: 0, kind: input, shape index: {}]
  %s1 = inlined_call_operand.vmem [shape: f32[8,32], index: 1, kind: input, shape index: {}]
  %s2 = inlined_call_operand.vmem [shape: f32[2368,64], index: 2, kind: input, shape index: {}]
  %s3 = inlined_call_operand.vmem [shape: f32[5,64], index: 3, kind: input, shape index: {}]
  %s4 = inlined_call_operand.vmem [shape: f32[64,1024], index: 4, kind: input, shape index: {}]
  %s5 = inlined_call_operand.hbm [shape: f32[8,64], index: 5, kind: output, shape index: {}]
  %s6 = sld [smem:[#allocation0]]
  $region30: #{tpu_custom_call.1} parent=0
    _
  %s8 = ssub.s32 1, %s6
  %s9 = scalar_select 0, %s8, %s6
  $region1: #{tpu_custom_call.1} parent=0
    #allocation2 [shape = 'u8[4096]{0}', space=vmem, size = 0x1000, scoped, tag = 'output window, operand 0, single buffered']
    #allocation3 [shape = 's32[1]{0}', space=sflag, size = 0x4, scoped, tag = 'scoped memory for tpu_custom_call.1']
    %10 = vsyncpa [#allocation3], 0
    // Predicated region
    $region2: #{tpu_custom_call.1} parent=1 // pred_check
      _
    $region3: #{tpu_custom_call.1} parent=1 // pred_check_branch
      %12 = sbr.rel (0) target = $region5
    $region4: #{tpu_custom_call.1} parent=1 // pred_region
      _
    $region5: #{tpu_custom_call.1} parent=1 // pred_fallthru
      _
    // Predicated region
    $region6: #{tpu_custom_call.1} parent=1 // pred_check
      _
    $region7: #{tpu_custom_call.1} parent=1 // pred_check_branch
      %14 = sbr.rel (0) target = $region9
    $region8: #{tpu_custom_call.1} parent=1 // pred_region
      _
    $region9: #{tpu_custom_call.1} parent=1 // pred_fallthru
      _
    // Predicated region
    $region10: #{tpu_custom_call.1} parent=1 // pred_check
      _
    $region11: #{tpu_custom_call.1} parent=1 // pred_check_branch
      %16 = sbr.rel (0) target = $region13
    $region12: #{tpu_custom_call.1} parent=1 // pred_region
      _
    $region13: #{tpu_custom_call.1} parent=1 // pred_fallthru
      _
    // Predicated region
    $region14: #{tpu_custom_call.1} parent=1 // pred_check
      _
    $region15: #{tpu_custom_call.1} parent=1 // pred_check_branch
      %18 = sbr.rel (0) target = $region17
    $region16: #{tpu_custom_call.1} parent=1 // pred_region
      _
    $region17: #{tpu_custom_call.1} parent=1 // pred_fallthru
      _
    // Predicated region
    $region18: #{tpu_custom_call.1} parent=1 // pred_check
      _
    $region19: #{tpu_custom_call.1} parent=1 // pred_check_branch
      %20 = sbr.rel (0) target = $region21
    $region20: #{tpu_custom_call.1} parent=1 // pred_region
      _
    $region21: #{tpu_custom_call.1} parent=1 // pred_fallthru
      _
    %v21 = vld [vmem:[%s0] sm:$0xff]
    %v22 = vld [vmem:[%s1] sm:$0xff]
    %v23 = vld [vmem:[%s4] sm:$0xff]
    %v24 = vld [vmem:[%s4 + $0x8] sm:$0xff]
    %v25 = vld [vmem:[%s4 + $0x10] sm:$0xff]
    %v26 = vld [vmem:[%s4 + $0x18] sm:$0xff]
    %v27 = vld [vmem:[%s4 + $0x20] sm:$0xff]
    %v28 = vld [vmem:[%s4 + $0x28] sm:$0xff]
    %v29 = vld [vmem:[%s4 + $0x30] sm:$0xff]
    %v30 = vld [vmem:[%s4 + $0x38] sm:$0xff]
    %v31 = vld [vmem:[%s4 + $0x40] sm:$0xff]
    %v32 = vld [vmem:[%s4 + $0x48] sm:$0xff]
    %v33 = vld [vmem:[%s4 + $0x50] sm:$0xff]
    %v34 = vld [vmem:[%s4 + $0x58] sm:$0xff]
    %v35 = vld [vmem:[%s4 + $0x60] sm:$0xff]
    %v36 = vld [vmem:[%s4 + $0x68] sm:$0xff]
    %v37 = vld [vmem:[%s4 + $0x70] sm:$0xff]
    %v38 = vld [vmem:[%s4 + $0x78] sm:$0xff]
    %v39 = vld [vmem:[%s4 + $0x80] sm:$0xff]
    %v40 = vld [vmem:[%s4 + $0x88] sm:$0xff]
    %v41 = vld [vmem:[%s4 + $0x90] sm:$0xff]
    %v42 = vld [vmem:[%s4 + $0x98] sm:$0xff]
    %v43 = vld [vmem:[%s4 + $0xa0] sm:$0xff]
    %v44 = vld [vmem:[%s4 + $0xa8] sm:$0xff]
    %v45 = vld [vmem:[%s4 + $0xb0] sm:$0xff]
    %v46 = vld [vmem:[%s4 + $0xb8] sm:$0xff]
    %v47 = vld [vmem:[%s4 + $0xc0] sm:$0xff]
    %v48 = vld [vmem:[%s4 + $0xc8] sm:$0xff]
    %v49 = vld [vmem:[%s4 + $0xd0] sm:$0xff]
    %v50 = vld [vmem:[%s4 + $0xd8] sm:$0xff]
    %v51 = vld [vmem:[%s4 + $0xe0] sm:$0xff]
    %v52 = vld [vmem:[%s4 + $0xe8] sm:$0xff]
    %v53 = vld [vmem:[%s4 + $0xf0] sm:$0xff]
    %v54 = vld [vmem:[%s4 + $0xf8] sm:$0xff]
    %v55 = vld [vmem:[%s4 + $0x100] sm:$0xff]
    %v56 = vld [vmem:[%s4 + $0x108] sm:$0xff]
    %v57 = vld [vmem:[%s4 + $0x110] sm:$0xff]
    %v58 = vld [vmem:[%s4 + $0x118] sm:$0xff]
    %v59 = vld [vmem:[%s4 + $0x120] sm:$0xff]
    %v60 = vld [vmem:[%s4 + $0x128] sm:$0xff]
    %v61 = vld [vmem:[%s4 + $0x130] sm:$0xff]
    %v62 = vld [vmem:[%s4 + $0x138] sm:$0xff]
    %v63 = vld [vmem:[%s4 + $0x140] sm:$0xff]
    %v64 = vld [vmem:[%s4 + $0x148] sm:$0xff]
    %v65 = vld [vmem:[%s4 + $0x150] sm:$0xff]
    %v66 = vld [vmem:[%s4 + $0x158] sm:$0xff]
    %v67 = vld [vmem:[%s4 + $0x160] sm:$0xff]
    %v68 = vld [vmem:[%s4 + $0x168] sm:$0xff]
    %v69 = vld [vmem:[%s4 + $0x170] sm:$0xff]
    %v70 = vld [vmem:[%s4 + $0x178] sm:$0xff]
    %v71 = vld [vmem:[%s4 + $0x180] sm:$0xff]
    %v72 = vld [vmem:[%s4 + $0x188] sm:$0xff]
    %v73 = vld [vmem:[%s4 + $0x190] sm:$0xff]
    %v74 = vld [vmem:[%s4 + $0x198] sm:$0xff]
    %v75 = vld [vmem:[%s4 + $0x1a0] sm:$0xff]
    %v76 = vld [vmem:[%s4 + $0x1a8] sm:$0xff]
    %v77 = vld [vmem:[%s4 + $0x1b0] sm:$0xff]
    %v78 = vld [vmem:[%s4 + $0x1b8] sm:$0xff]
    %v79 = vld [vmem:[%s4 + $0x1c0] sm:$0xff]
    %v80 = vld [vmem:[%s4 + $0x1c8] sm:$0xff]
    %v81 = vld [vmem:[%s4 + $0x1d0] sm:$0xff]
    %v82 = vld [vmem:[%s4 + $0x1d8] sm:$0xff]
    %v83 = vld [vmem:[%s4 + $0x1e0] sm:$0xff]
    %v84 = vld [vmem:[%s4 + $0x1e8] sm:$0xff]
    %v85 = vld [vmem:[%s4 + $0x1f0] sm:$0xff]
    %v86 = vld [vmem:[%s4 + $0x1f8] sm:$0xff]
    %vm87 = vcmask 261120
    %v89 = vsel %vm87, %v21, 0
    %91 = vmatpush.msra.mxu0 0.0
    %92 = vmatpush.msra.mxu0 0.0
    %93 = vmatpush.msra.mxu0 0.0
    %94 = vmatpush.msra.mxu0 0.0
    %95 = vmatpush.msra.mxu0 0.0
    %96 = vmatpush.msra.mxu0 0.0
    %97 = vmatpush.msra.mxu0 0.0
    %98 = vmatpush.msra.mxu0 0.0
    %99 = vmatpush.msra.mxu0 0.0
    %100 = vmatpush.msra.mxu0 0.0
    %101 = vmatpush.msra.mxu0 0.0
    %102 = vmatpush.msra.mxu0 0.0
    %103 = vmatpush.msra.mxu0 %v47
    %104 = vmatpush.msra.mxu0 %v39
    %105 = vmatpush.msra.mxu0 %v31
    %106 = vmatpush.msra.mxu0 %v23
    %107 = vmatmul.f32.gmra.mxu0 %v89
    %v108 = vpop.f32.mrf.mxu0
    %v109 = vadd.f32 0.0, %v108
    %110 = vdwg.mxu0
    %111 = vmatpush.msra.mxu0 0.0
    %112 = vmatpush.msra.mxu0 0.0
    %113 = vmatpush.msra.mxu0 0.0
    %114 = vmatpush.msra.mxu0 0.0
    %115 = vmatpush.msra.mxu0 0.0
    %116 = vmatpush.msra.mxu0 0.0
    %117 = vmatpush.msra.mxu0 0.0
    %118 = vmatpush.msra.mxu0 0.0
    %119 = vmatpush.msra.mxu0 0.0
    %120 = vmatpush.msra.mxu0 0.0
    %121 = vmatpush.msra.mxu0 0.0
    %122 = vmatpush.msra.mxu0 0.0
    %123 = vmatpush.msra.mxu0 %v48
    %124 = vmatpush.msra.mxu0 %v40
    %125 = vmatpush.msra.mxu0 %v32
    %126 = vmatpush.msra.mxu0 %v24
    %127 = vmatmul.f32.gmra.mxu0 %v89
    %v128 = vpop.f32.mrf.mxu0
    %v129 = vadd.f32 0.0, %v128
    %130 = vdwg.mxu0
    %131 = vmatpush.msra.mxu0 0.0
    %132 = vmatpush.msra.mxu0 0.0
    %133 = vmatpush.msra.mxu0 0.0
    %134 = vmatpush.msra.mxu0 0.0
    %135 = vmatpush.msra.mxu0 0.0
    %136 = vmatpush.msra.mxu0 0.0
    %137 = vmatpush.msra.mxu0 0.0
    %138 = vmatpush.msra.mxu0 0.0
    %139 = vmatpush.msra.mxu0 0.0
    %140 = vmatpush.msra.mxu0 0.0
    %141 = vmatpush.msra.mxu0 0.0
    %142 = vmatpush.msra.mxu0 0.0
    %143 = vmatpush.msra.mxu0 %v49
    %144 = vmatpush.msra.mxu0 %v41
    %145 = vmatpush.msra.mxu0 %v33
    %146 = vmatpush.msra.mxu0 %v25
    %147 = vmatmul.f32.gmra.mxu0 %v89
    %v148 = vpop.f32.mrf.mxu0
    %v149 = vadd.f32 0.0, %v148
    %150 = vdwg.mxu0
    %151 = vmatpush.msra.mxu0 0.0
    %152 = vmatpush.msra.mxu0 0.0
    %153 = vmatpush.msra.mxu0 0.0
    %154 = vmatpush.msra.mxu0 0.0
    %155 = vmatpush.msra.mxu0 0.0
    %156 = vmatpush.msra.mxu0 0.0
    %157 = vmatpush.msra.mxu0 0.0
    %158 = vmatpush.msra.mxu0 0.0
    %159 = vmatpush.msra.mxu0 0.0
    %160 = vmatpush.msra.mxu0 0.0
    %161 = vmatpush.msra.mxu0 0.0
    %162 = vmatpush.msra.mxu0 0.0
    %163 = vmatpush.msra.mxu0 %v50
    %164 = vmatpush.msra.mxu0 %v42
    %165 = vmatpush.msra.mxu0 %v34
    %166 = vmatpush.msra.mxu0 %v26
    %167 = vmatmul.f32.gmra.mxu0 %v89
    %v168 = vpop.f32.mrf.mxu0
    %v169 = vadd.f32 0.0, %v168
    %170 = vdwg.mxu0
    %171 = vmatpush.msra.mxu0 0.0
    %172 = vmatpush.msra.mxu0 0.0
    %173 = vmatpush.msra.mxu0 0.0
    %174 = vmatpush.msra.mxu0 0.0
    %175 = vmatpush.msra.mxu0 0.0
    %176 = vmatpush.msra.mxu0 0.0
    %177 = vmatpush.msra.mxu0 0.0
    %178 = vmatpush.msra.mxu0 0.0
    %179 = vmatpush.msra.mxu0 0.0
    %180 = vmatpush.msra.mxu0 0.0
    %181 = vmatpush.msra.mxu0 0.0
    %182 = vmatpush.msra.mxu0 0.0
    %183 = vmatpush.msra.mxu0 %v51
    %184 = vmatpush.msra.mxu0 %v43
    %185 = vmatpush.msra.mxu0 %v35
    %186 = vmatpush.msra.mxu0 %v27
    %187 = vmatmul.f32.gmra.mxu0 %v89
    %v188 = vpop.f32.mrf.mxu0
    %v189 = vadd.f32 0.0, %v188
    %190 = vdwg.mxu0
    %191 = vmatpush.msra.mxu0 0.0
    %192 = vmatpush.msra.mxu0 0.0
    %193 = vmatpush.msra.mxu0 0.0
    %194 = vmatpush.msra.mxu0 0.0
    %195 = vmatpush.msra.mxu0 0.0
    %196 = vmatpush.msra.mxu0 0.0
    %197 = vmatpush.msra.mxu0 0.0
    %198 = vmatpush.msra.mxu0 0.0
    %199 = vmatpush.msra.mxu0 0.0
    %200 = vmatpush.msra.mxu0 0.0
    %201 = vmatpush.msra.mxu0 0.0
    %202 = vmatpush.msra.mxu0 0.0
    %203 = vmatpush.msra.mxu0 %v52
    %204 = vmatpush.msra.mxu0 %v44
    %205 = vmatpush.msra.mxu0 %v36
    %206 = vmatpush.msra.mxu0 %v28
    %207 = vmatmul.f32.gmra.mxu0 %v89
    %v208 = vpop.f32.mrf.mxu0
    %v209 = vadd.f32 0.0, %v208
    %210 = vdwg.mxu0
    %211 = vmatpush.msra.mxu0 0.0
    %212 = vmatpush.msra.mxu0 0.0
    %213 = vmatpush.msra.mxu0 0.0
    %214 = vmatpush.msra.mxu0 0.0
    %215 = vmatpush.msra.mxu0 0.0
    %216 = vmatpush.msra.mxu0 0.0
    %217 = vmatpush.msra.mxu0 0.0
    %218 = vmatpush.msra.mxu0 0.0
    %219 = vmatpush.msra.mxu0 0.0
    %220 = vmatpush.msra.mxu0 0.0
    %221 = vmatpush.msra.mxu0 0.0
    %222 = vmatpush.msra.mxu0 0.0
    %223 = vmatpush.msra.mxu0 %v53
    %224 = vmatpush.msra.mxu0 %v45
    %225 = vmatpush.msra.mxu0 %v37
    %226 = vmatpush.msra.mxu0 %v29
    %227 = vmatmul.f32.gmra.mxu0 %v89
    %v228 = vpop.f32.mrf.mxu0
    %v229 = vadd.f32 0.0, %v228
    %230 = vdwg.mxu0
    %231 = vmatpush.msra.mxu0 0.0
    %232 = vmatpush.msra.mxu0 0.0
    %233 = vmatpush.msra.mxu0 0.0
    %234 = vmatpush.msra.mxu0 0.0
    %235 = vmatpush.msra.mxu0 0.0
    %236 = vmatpush.msra.mxu0 0.0
    %237 = vmatpush.msra.mxu0 0.0
    %238 = vmatpush.msra.mxu0 0.0
    %239 = vmatpush.msra.mxu0 0.0
    %240 = vmatpush.msra.mxu0 0.0
    %241 = vmatpush.msra.mxu0 0.0
    %242 = vmatpush.msra.mxu0 0.0
    %243 = vmatpush.msra.mxu0 %v54
    %244 = vmatpush.msra.mxu0 %v46
    %245 = vmatpush.msra.mxu0 %v38
    %246 = vmatpush.msra.mxu0 %v30
    %247 = vmatmul.f32.gmra.mxu0 %v89
    %v248 = vpop.f32.mrf.mxu0
    %v249 = vadd.f32 0.0, %v248
    %250 = vdwg.mxu0
    %v252 = vsel %vm87, %v22, 0
    %254 = vmatpush.msra.mxu0 0.0
    %255 = vmatpush.msra.mxu0 0.0
    %256 = vmatpush.msra.mxu0 0.0
    %257 = vmatpush.msra.mxu0 0.0
    %258 = vmatpush.msra.mxu0 0.0
    %259 = vmatpush.msra.mxu0 0.0
    %260 = vmatpush.msra.mxu0 0.0
    %261 = vmatpush.msra.mxu0 0.0
    %262 = vmatpush.msra.mxu0 0.0
    %263 = vmatpush.msra.mxu0 0.0
    %264 = vmatpush.msra.mxu0 0.0
    %265 = vmatpush.msra.mxu0 0.0
    %266 = vmatpush.msra.mxu0 %v79
    %267 = vmatpush.msra.mxu0 %v71
    %268 = vmatpush.msra.mxu0 %v63
    %269 = vmatpush.msra.mxu0 %v55
    %270 = vmatmul.f32.gmra.mxu0 %v252
    %v271 = vpop.f32.mrf.mxu0
    %v272 = vadd.f32 0.0, %v271
    %273 = vdwg.mxu0
    %274 = vmatpush.msra.mxu0 0.0
    %275 = vmatpush.msra.mxu0 0.0
    %276 = vmatpush.msra.mxu0 0.0
    %277 = vmatpush.msra.mxu0 0.0
    %278 = vmatpush.msra.mxu0 0.0
    %279 = vmatpush.msra.mxu0 0.0
    %280 = vmatpush.msra.mxu0 0.0
    %281 = vmatpush.msra.mxu0 0.0
    %282 = vmatpush.msra.mxu0 0.0
    %283 = vmatpush.msra.mxu0 0.0
    %284 = vmatpush.msra.mxu0 0.0
    %285 = vmatpush.msra.mxu0 0.0
    %286 = vmatpush.msra.mxu0 %v80
    %287 = vmatpush.msra.mxu0 %v72
    %288 = vmatpush.msra.mxu0 %v64
    %289 = vmatpush.msra.mxu0 %v56
    %290 = vmatmul.f32.gmra.mxu0 %v252
    %v291 = vpop.f32.mrf.mxu0
    %v292 = vadd.f32 0.0, %v291
    %293 = vdwg.mxu0
    %294 = vmatpush.msra.mxu0 0.0
    %295 = vmatpush.msra.mxu0 0.0
    %296 = vmatpush.msra.mxu0 0.0
    %297 = vmatpush.msra.mxu0 0.0
    %298 = vmatpush.msra.mxu0 0.0
    %299 = vmatpush.msra.mxu0 0.0
    %300 = vmatpush.msra.mxu0 0.0
    %301 = vmatpush.msra.mxu0 0.0
    %302 = vmatpush.msra.mxu0 0.0
    %303 = vmatpush.msra.mxu0 0.0
    %304 = vmatpush.msra.mxu0 0.0
    %305 = vmatpush.msra.mxu0 0.0
    %306 = vmatpush.msra.mxu0 %v81
    %307 = vmatpush.msra.mxu0 %v73
    %308 = vmatpush.msra.mxu0 %v65
    %309 = vmatpush.msra.mxu0 %v57
    %310 = vmatmul.f32.gmra.mxu0 %v252
    %v311 = vpop.f32.mrf.mxu0
    %v312 = vadd.f32 0.0, %v311
    %313 = vdwg.mxu0
    %314 = vmatpush.msra.mxu0 0.0
    %315 = vmatpush.msra.mxu0 0.0
    %316 = vmatpush.msra.mxu0 0.0
    %317 = vmatpush.msra.mxu0 0.0
    %318 = vmatpush.msra.mxu0 0.0
    %319 = vmatpush.msra.mxu0 0.0
    %320 = vmatpush.msra.mxu0 0.0
    %321 = vmatpush.msra.mxu0 0.0
    %322 = vmatpush.msra.mxu0 0.0
    %323 = vmatpush.msra.mxu0 0.0
    %324 = vmatpush.msra.mxu0 0.0
    %325 = vmatpush.msra.mxu0 0.0
    %326 = vmatpush.msra.mxu0 %v82
    %327 = vmatpush.msra.mxu0 %v74
    %328 = vmatpush.msra.mxu0 %v66
    %329 = vmatpush.msra.mxu0 %v58
    %330 = vmatmul.f32.gmra.mxu0 %v252
    %v331 = vpop.f32.mrf.mxu0
    %v332 = vadd.f32 0.0, %v331
    %333 = vdwg.mxu0
    %334 = vmatpush.msra.mxu0 0.0
    %335 = vmatpush.msra.mxu0 0.0
    %336 = vmatpush.msra.mxu0 0.0
    %337 = vmatpush.msra.mxu0 0.0
    %338 = vmatpush.msra.mxu0 0.0
    %339 = vmatpush.msra.mxu0 0.0
    %340 = vmatpush.msra.mxu0 0.0
    %341 = vmatpush.msra.mxu0 0.0
    %342 = vmatpush.msra.mxu0 0.0
    %343 = vmatpush.msra.mxu0 0.0
    %344 = vmatpush.msra.mxu0 0.0
    %345 = vmatpush.msra.mxu0 0.0
    %346 = vmatpush.msra.mxu0 %v83
    %347 = vmatpush.msra.mxu0 %v75
    %348 = vmatpush.msra.mxu0 %v67
    %349 = vmatpush.msra.mxu0 %v59
    %350 = vmatmul.f32.gmra.mxu0 %v252
    %v351 = vpop.f32.mrf.mxu0
    %v352 = vadd.f32 0.0, %v351
    %353 = vdwg.mxu0
    %354 = vmatpush.msra.mxu0 0.0
    %355 = vmatpush.msra.mxu0 0.0
    %356 = vmatpush.msra.mxu0 0.0
    %357 = vmatpush.msra.mxu0 0.0
    %358 = vmatpush.msra.mxu0 0.0
    %359 = vmatpush.msra.mxu0 0.0
    %360 = vmatpush.msra.mxu0 0.0
    %361 = vmatpush.msra.mxu0 0.0
    %362 = vmatpush.msra.mxu0 0.0
    %363 = vmatpush.msra.mxu0 0.0
    %364 = vmatpush.msra.mxu0 0.0
    %365 = vmatpush.msra.mxu0 0.0
    %366 = vmatpush.msra.mxu0 %v84
    %367 = vmatpush.msra.mxu0 %v76
    %368 = vmatpush.msra.mxu0 %v68
    %369 = vmatpush.msra.mxu0 %v60
    %370 = vmatmul.f32.gmra.mxu0 %v252
    %v371 = vpop.f32.mrf.mxu0
    %v372 = vadd.f32 0.0, %v371
    %373 = vdwg.mxu0
    %374 = vmatpush.msra.mxu0 0.0
    %375 = vmatpush.msra.mxu0 0.0
    %376 = vmatpush.msra.mxu0 0.0
    %377 = vmatpush.msra.mxu0 0.0
    %378 = vmatpush.msra.mxu0 0.0
    %379 = vmatpush.msra.mxu0 0.0
    %380 = vmatpush.msra.mxu0 0.0
    %381 = vmatpush.msra.mxu0 0.0
    %382 = vmatpush.msra.mxu0 0.0
    %383 = vmatpush.msra.mxu0 0.0
    %384 = vmatpush.msra.mxu0 0.0
    %385 = vmatpush.msra.mxu0 0.0
    %386 = vmatpush.msra.mxu0 %v85
    %387 = vmatpush.msra.mxu0 %v77
    %388 = vmatpush.msra.mxu0 %v69
    %389 = vmatpush.msra.mxu0 %v61
    %390 = vmatmul.f32.gmra.mxu0 %v252
    %v391 = vpop.f32.mrf.mxu0
    %v392 = vadd.f32 0.0, %v391
    %393 = vdwg.mxu0
    %394 = vmatpush.msra.mxu0 0.0
    %395 = vmatpush.msra.mxu0 0.0
    %396 = vmatpush.msra.mxu0 0.0
    %397 = vmatpush.msra.mxu0 0.0
    %398 = vmatpush.msra.mxu0 0.0
    %399 = vmatpush.msra.mxu0 0.0
    %400 = vmatpush.msra.mxu0 0.0
    %401 = vmatpush.msra.mxu0 0.0
    %402 = vmatpush.msra.mxu0 0.0
    %403 = vmatpush.msra.mxu0 0.0
    %404 = vmatpush.msra.mxu0 0.0
    %405 = vmatpush.msra.mxu0 0.0
    %406 = vmatpush.msra.mxu0 %v86
    %407 = vmatpush.msra.mxu0 %v78
    %408 = vmatpush.msra.mxu0 %v70
    %409 = vmatpush.msra.mxu0 %v62
    %410 = vmatmul.f32.gmra.mxu0 %v252
    %v411 = vpop.f32.mrf.mxu0
    %v412 = vadd.f32 0.0, %v411
    %413 = vdwg.mxu0
    %v414 = vmul.f32 %v109, %v272
    %v415 = vmul.f32 %v129, %v292
    %v416 = vmul.f32 %v149, %v312
    %v417 = vmul.f32 %v169, %v332
    %v418 = vmul.f32 %v189, %v352
    %v419 = vmul.f32 %v209, %v372
    %v420 = vmul.f32 %v229, %v392
    %v421 = vmul.f32 %v249, %v412
    %v422 = vld [vmem:[%s2] sm:$0xff]
    %v423 = vld [vmem:[%s2 + $0x8] sm:$0xff]
    %v424 = vld [vmem:[%s2 + $0x10] sm:$0xff]
    %v425 = vld [vmem:[%s2 + $0x18] sm:$0xff]
    %v426 = vld [vmem:[%s2 + $0x20] sm:$0xff]
    %v427 = vld [vmem:[%s2 + $0x28] sm:$0xff]
    %v428 = vld [vmem:[%s2 + $0x30] sm:$0xff]
    %v429 = vld [vmem:[%s2 + $0x38] sm:$0xff]
    %v430 = vld [vmem:[%s2 + $0x40] sm:$0xff]
    %v431 = vld [vmem:[%s2 + $0x48] sm:$0xff]
    %v432 = vld [vmem:[%s2 + $0x50] sm:$0xff]
    %v433 = vld [vmem:[%s2 + $0x58] sm:$0xff]
    %v434 = vld [vmem:[%s2 + $0x60] sm:$0xff]
    %v435 = vld [vmem:[%s2 + $0x68] sm:$0xff]
    %v436 = vld [vmem:[%s2 + $0x70] sm:$0xff]
    %v437 = vld [vmem:[%s2 + $0x78] sm:$0xff]
    %v438 = vld [vmem:[%s2 + $0x80] sm:$0xff]
    %v439 = vld [vmem:[%s2 + $0x88] sm:$0xff]
    %v440 = vld [vmem:[%s2 + $0x90] sm:$0xff]
    %v441 = vld [vmem:[%s2 + $0x98] sm:$0xff]
    %v442 = vld [vmem:[%s2 + $0xa0] sm:$0xff]
    %v443 = vld [vmem:[%s2 + $0xa8] sm:$0xff]
    %v444 = vld [vmem:[%s2 + $0xb0] sm:$0xff]
    %v445 = vld [vmem:[%s2 + $0xb8] sm:$0xff]
    %v446 = vld [vmem:[%s2 + $0xc0] sm:$0xff]
    %v447 = vld [vmem:[%s2 + $0xc8] sm:$0xff]
    %v448 = vld [vmem:[%s2 + $0xd0] sm:$0xff]
    %v449 = vld [vmem:[%s2 + $0xd8] sm:$0xff]
    %v450 = vld [vmem:[%s2 + $0xe0] sm:$0xff]
    %v451 = vld [vmem:[%s2 + $0xe8] sm:$0xff]
    %v452 = vld [vmem:[%s2 + $0xf0] sm:$0xff]
    %v453 = vld [vmem:[%s2 + $0xf8] sm:$0xff]
    %v454 = vld [vmem:[%s2 + $0x100] sm:$0xff]
    %v455 = vld [vmem:[%s2 + $0x108] sm:$0xff]
    %v456 = vld [vmem:[%s2 + $0x110] sm:$0xff]
    %v457 = vld [vmem:[%s2 + $0x118] sm:$0xff]
    %v458 = vld [vmem:[%s2 + $0x120] sm:$0xff]
    %v459 = vld [vmem:[%s2 + $0x128] sm:$0xff]
    %v460 = vld [vmem:[%s2 + $0x130] sm:$0xff]
    %v461 = vld [vmem:[%s2 + $0x138] sm:$0xff]
    %v462 = vld [vmem:[%s2 + $0x140] sm:$0xff]
    %v463 = vld [vmem:[%s2 + $0x148] sm:$0xff]
    %v464 = vld [vmem:[%s2 + $0x150] sm:$0xff]
    %v465 = vld [vmem:[%s2 + $0x158] sm:$0xff]
    %v466 = vld [vmem:[%s2 + $0x160] sm:$0xff]
    %v467 = vld [vmem:[%s2 + $0x168] sm:$0xff]
    %v468 = vld [vmem:[%s2 + $0x170] sm:$0xff]
    %v469 = vld [vmem:[%s2 + $0x178] sm:$0xff]
    %v470 = vld [vmem:[%s2 + $0x180] sm:$0xff]
    %v471 = vld [vmem:[%s2 + $0x188] sm:$0xff]
    %v472 = vld [vmem:[%s2 + $0x190] sm:$0xff]
    %v473 = vld [vmem:[%s2 + $0x198] sm:$0xff]
    %v474 = vld [vmem:[%s2 + $0x1a0] sm:$0xff]
    %v475 = vld [vmem:[%s2 + $0x1a8] sm:$0xff]
    %v476 = vld [vmem:[%s2 + $0x1b0] sm:$0xff]
    %v477 = vld [vmem:[%s2 + $0x1b8] sm:$0xff]
    %v478 = vld [vmem:[%s2 + $0x1c0] sm:$0xff]
    %v479 = vld [vmem:[%s2 + $0x1c8] sm:$0xff]
    %v480 = vld [vmem:[%s2 + $0x1d0] sm:$0xff]
    %v481 = vld [vmem:[%s2 + $0x1d8] sm:$0xff]
    %v482 = vld [vmem:[%s2 + $0x1e0] sm:$0xff]
    %v483 = vld [vmem:[%s2 + $0x1e8] sm:$0xff]
    %v484 = vld [vmem:[%s2 + $0x1f0] sm:$0xff]
    %v485 = vld [vmem:[%s2 + $0x1f8] sm:$0xff]
    %v486 = vld [vmem:[%s2 + $0x200] sm:$0xff]
    %v487 = vld [vmem:[%s2 + $0x208] sm:$0xff]
    %v488 = vld [vmem:[%s2 + $0x210] sm:$0xff]
    %v489 = vld [vmem:[%s2 + $0x218] sm:$0xff]
    %v490 = vld [vmem:[%s2 + $0x220] sm:$0xff]
    %v491 = vld [vmem:[%s2 + $0x228] sm:$0xff]
    %v492 = vld [vmem:[%s2 + $0x230] sm:$0xff]
    %v493 = vld [vmem:[%s2 + $0x238] sm:$0xff]
    %v494 = vld [vmem:[%s2 + $0x240] sm:$0xff]
    %v495 = vld [vmem:[%s2 + $0x248] sm:$0xff]
    %v496 = vld [vmem:[%s2 + $0x250] sm:$0xff]
    %v497 = vld [vmem:[%s2 + $0x258] sm:$0xff]
    %v498 = vld [vmem:[%s2 + $0x260] sm:$0xff]
    %v499 = vld [vmem:[%s2 + $0x268] sm:$0xff]
    %v500 = vld [vmem:[%s2 + $0x270] sm:$0xff]
    %v501 = vld [vmem:[%s2 + $0x278] sm:$0xff]
    %v502 = vld [vmem:[%s2 + $0x280] sm:$0xff]
    %v503 = vld [vmem:[%s2 + $0x288] sm:$0xff]
    %v504 = vld [vmem:[%s2 + $0x290] sm:$0xff]
    %v505 = vld [vmem:[%s2 + $0x298] sm:$0xff]
    %v506 = vld [vmem:[%s2 + $0x2a0] sm:$0xff]
    %v507 = vld [vmem:[%s2 + $0x2a8] sm:$0xff]
    %v508 = vld [vmem:[%s2 + $0x2b0] sm:$0xff]
    %v509 = vld [vmem:[%s2 + $0x2b8] sm:$0xff]
    %v510 = vld [vmem:[%s2 + $0x2c0] sm:$0xff]
    %v511 = vld [vmem:[%s2 + $0x2c8] sm:$0xff]
    %v512 = vld [vmem:[%s2 + $0x2d0] sm:$0xff]
    %v513 = vld [vmem:[%s2 + $0x2d8] sm:$0xff]
    %v514 = vld [vmem:[%s2 + $0x2e0] sm:$0xff]
    %v515 = vld [vmem:[%s2 + $0x2e8] sm:$0xff]
    %v516 = vld [vmem:[%s2 + $0x2f0] sm:$0xff]
    %v517 = vld [vmem:[%s2 + $0x2f8] sm:$0xff]
    %v518 = vld [vmem:[%s2 + $0x300] sm:$0xff]
    %v519 = vld [vmem:[%s2 + $0x308] sm:$0xff]
    %v520 = vld [vmem:[%s2 + $0x310] sm:$0xff]
    %v521 = vld [vmem:[%s2 + $0x318] sm:$0xff]
    %v522 = vld [vmem:[%s2 + $0x320] sm:$0xff]
    %v523 = vld [vmem:[%s2 + $0x328] sm:$0xff]
    %v524 = vld [vmem:[%s2 + $0x330] sm:$0xff]
    %v525 = vld [vmem:[%s2 + $0x338] sm:$0xff]
    %v526 = vld [vmem:[%s2 + $0x340] sm:$0xff]
    %v527 = vld [vmem:[%s2 + $0x348] sm:$0xff]
    %v528 = vld [vmem:[%s2 + $0x350] sm:$0xff]
    %v529 = vld [vmem:[%s2 + $0x358] sm:$0xff]
    %v530 = vld [vmem:[%s2 + $0x360] sm:$0xff]
    %v531 = vld [vmem:[%s2 + $0x368] sm:$0xff]
    %v532 = vld [vmem:[%s2 + $0x370] sm:$0xff]
    %v533 = vld [vmem:[%s2 + $0x378] sm:$0xff]
    %v534 = vld [vmem:[%s2 + $0x380] sm:$0xff]
    %v535 = vld [vmem:[%s2 + $0x388] sm:$0xff]
    %v536 = vld [vmem:[%s2 + $0x390] sm:$0xff]
    %v537 = vld [vmem:[%s2 + $0x398] sm:$0xff]
    %v538 = vld [vmem:[%s2 + $0x3a0] sm:$0xff]
    %v539 = vld [vmem:[%s2 + $0x3a8] sm:$0xff]
    %v540 = vld [vmem:[%s2 + $0x3b0] sm:$0xff]
    %v541 = vld [vmem:[%s2 + $0x3b8] sm:$0xff]
    %v542 = vld [vmem:[%s2 + $0x3c0] sm:$0xff]
    %v543 = vld [vmem:[%s2 + $0x3c8] sm:$0xff]
    %v544 = vld [vmem:[%s2 + $0x3d0] sm:$0xff]
    %v545 = vld [vmem:[%s2 + $0x3d8] sm:$0xff]
    %v546 = vld [vmem:[%s2 + $0x3e0] sm:$0xff]
    %v547 = vld [vmem:[%s2 + $0x3e8] sm:$0xff]
    %v548 = vld [vmem:[%s2 + $0x3f0] sm:$0xff]
    %v549 = vld [vmem:[%s2 + $0x3f8] sm:$0xff]
    %v550 = vld [vmem:[%s3 + $0x1] sm:$0x1]
    %v551 = vperm.slane %v550, 0
    %552 = vmatpush.msra.mxu0 %v437
    %553 = vmatpush.msra.mxu0 %v436
    %554 = vmatpush.msra.mxu0 %v435
    %555 = vmatpush.msra.mxu0 %v434
    %556 = vmatpush.msra.mxu0 %v433
    %557 = vmatpush.msra.mxu0 %v432
    %558 = vmatpush.msra.mxu0 %v431
    %559 = vmatpush.msra.mxu0 %v430
    %560 = vmatpush.msra.mxu0 %v429
    %561 = vmatpush.msra.mxu0 %v428
    %562 = vmatpush.msra.mxu0 %v427
    %563 = vmatpush.msra.mxu0 %v426
    %564 = vmatpush.msra.mxu0 %v425
    %565 = vmatpush.msra.mxu0 %v424
    %566 = vmatpush.msra.mxu0 %v423
    %567 = vmatpush.msra.mxu0 %v422
    %568 = vmatmul.f32.gmra.mxu0 %v414
    %v569 = vpop.f32.mrf.mxu0
    %v570 = vadd.f32 %v551, %v569
    %571 = vdwg.mxu0
    %572 = vmatpush.msra.mxu0 %v453
    %573 = vmatpush.msra.mxu0 %v452
    %574 = vmatpush.msra.mxu0 %v451
    %575 = vmatpush.msra.mxu0 %v450
    %576 = vmatpush.msra.mxu0 %v449
    %577 = vmatpush.msra.mxu0 %v448
    %578 = vmatpush.msra.mxu0 %v447
    %579 = vmatpush.msra.mxu0 %v446
    %580 = vmatpush.msra.mxu0 %v445
    %581 = vmatpush.msra.mxu0 %v444
    %582 = vmatpush.msra.mxu0 %v443
    %583 = vmatpush.msra.mxu0 %v442
    %584 = vmatpush.msra.mxu0 %v441
    %585 = vmatpush.msra.mxu0 %v440
    %586 = vmatpush.msra.mxu0 %v439
    %587 = vmatpush.msra.mxu0 %v438
    %588 = vmatmul.f32.gmra.mxu0 %v415
    %v589 = vpop.f32.mrf.mxu0
    %v590 = vadd.f32 %v570, %v589
    %591 = vdwg.mxu0
    %592 = vmatpush.msra.mxu0 %v469
    %593 = vmatpush.msra.mxu0 %v468
    %594 = vmatpush.msra.mxu0 %v467
    %595 = vmatpush.msra.mxu0 %v466
    %596 = vmatpush.msra.mxu0 %v465
    %597 = vmatpush.msra.mxu0 %v464
    %598 = vmatpush.msra.mxu0 %v463
    %599 = vmatpush.msra.mxu0 %v462
    %600 = vmatpush.msra.mxu0 %v461
    %601 = vmatpush.msra.mxu0 %v460
    %602 = vmatpush.msra.mxu0 %v459
    %603 = vmatpush.msra.mxu0 %v458
    %604 = vmatpush.msra.mxu0 %v457
    %605 = vmatpush.msra.mxu0 %v456
    %606 = vmatpush.msra.mxu0 %v455
    %607 = vmatpush.msra.mxu0 %v454
    %608 = vmatmul.f32.gmra.mxu0 %v416
    %v609 = vpop.f32.mrf.mxu0
    %v610 = vadd.f32 %v590, %v609
    %611 = vdwg.mxu0
    %612 = vmatpush.msra.mxu0 %v485
    %613 = vmatpush.msra.mxu0 %v484
    %614 = vmatpush.msra.mxu0 %v483
    %615 = vmatpush.msra.mxu0 %v482
    %616 = vmatpush.msra.mxu0 %v481
    %617 = vmatpush.msra.mxu0 %v480
    %618 = vmatpush.msra.mxu0 %v479
    %619 = vmatpush.msra.mxu0 %v478
    %620 = vmatpush.msra.mxu0 %v477
    %621 = vmatpush.msra.mxu0 %v476
    %622 = vmatpush.msra.mxu0 %v475
    %623 = vmatpush.msra.mxu0 %v474
    %624 = vmatpush.msra.mxu0 %v473
    %625 = vmatpush.msra.mxu0 %v472
    %626 = vmatpush.msra.mxu0 %v471
    %627 = vmatpush.msra.mxu0 %v470
    %628 = vmatmul.f32.gmra.mxu0 %v417
    %v629 = vpop.f32.mrf.mxu0
    %v630 = vadd.f32 %v610, %v629
    %631 = vdwg.mxu0
    %632 = vmatpush.msra.mxu0 %v501
    %633 = vmatpush.msra.mxu0 %v500
    %634 = vmatpush.msra.mxu0 %v499
    %635 = vmatpush.msra.mxu0 %v498
    %636 = vmatpush.msra.mxu0 %v497
    %637 = vmatpush.msra.mxu0 %v496
    %638 = vmatpush.msra.mxu0 %v495
    %639 = vmatpush.msra.mxu0 %v494
    %640 = vmatpush.msra.mxu0 %v493
    %641 = vmatpush.msra.mxu0 %v492
    %642 = vmatpush.msra.mxu0 %v491
    %643 = vmatpush.msra.mxu0 %v490
    %644 = vmatpush.msra.mxu0 %v489
    %645 = vmatpush.msra.mxu0 %v488
    %646 = vmatpush.msra.mxu0 %v487
    %647 = vmatpush.msra.mxu0 %v486
    %648 = vmatmul.f32.gmra.mxu0 %v418
    %v649 = vpop.f32.mrf.mxu0
    %v650 = vadd.f32 %v630, %v649
    %651 = vdwg.mxu0
    %652 = vmatpush.msra.mxu0 %v517
    %653 = vmatpush.msra.mxu0 %v516
    %654 = vmatpush.msra.mxu0 %v515
    %655 = vmatpush.msra.mxu0 %v514
    %656 = vmatpush.msra.mxu0 %v513
    %657 = vmatpush.msra.mxu0 %v512
    %658 = vmatpush.msra.mxu0 %v511
    %659 = vmatpush.msra.mxu0 %v510
    %660 = vmatpush.msra.mxu0 %v509
    %661 = vmatpush.msra.mxu0 %v508
    %662 = vmatpush.msra.mxu0 %v507
    %663 = vmatpush.msra.mxu0 %v506
    %664 = vmatpush.msra.mxu0 %v505
    %665 = vmatpush.msra.mxu0 %v504
    %666 = vmatpush.msra.mxu0 %v503
    %667 = vmatpush.msra.mxu0 %v502
    %668 = vmatmul.f32.gmra.mxu0 %v419
    %v669 = vpop.f32.mrf.mxu0
    %v670 = vadd.f32 %v650, %v669
    %671 = vdwg.mxu0
    %672 = vmatpush.msra.mxu0 %v533
    %673 = vmatpush.msra.mxu0 %v532
    %674 = vmatpush.msra.mxu0 %v531
    %675 = vmatpush.msra.mxu0 %v530
    %676 = vmatpush.msra.mxu0 %v529
    %677 = vmatpush.msra.mxu0 %v528
    %678 = vmatpush.msra.mxu0 %v527
    %679 = vmatpush.msra.mxu0 %v526
    %680 = vmatpush.msra.mxu0 %v525
    %681 = vmatpush.msra.mxu0 %v524
    %682 = vmatpush.msra.mxu0 %v523
    %683 = vmatpush.msra.mxu0 %v522
    %684 = vmatpush.msra.mxu0 %v521
    %685 = vmatpush.msra.mxu0 %v520
    %686 = vmatpush.msra.mxu0 %v519
    %687 = vmatpush.msra.mxu0 %v518
    %688 = vmatmul.f32.gmra.mxu0 %v420
    %v689 = vpop.f32.mrf.mxu0
    %v690 = vadd.f32 %v670, %v689
    %691 = vdwg.mxu0
    %692 = vmatpush.msra.mxu0 %v549
    %693 = vmatpush.msra.mxu0 %v548
    %694 = vmatpush.msra.mxu0 %v547
    %695 = vmatpush.msra.mxu0 %v546
    %696 = vmatpush.msra.mxu0 %v545
    %697 = vmatpush.msra.mxu0 %v544
    %698 = vmatpush.msra.mxu0 %v543
    %699 = vmatpush.msra.mxu0 %v542
    %700 = vmatpush.msra.mxu0 %v541
    %701 = vmatpush.msra.mxu0 %v540
    %702 = vmatpush.msra.mxu0 %v539
    %703 = vmatpush.msra.mxu0 %v538
    %704 = vmatpush.msra.mxu0 %v537
    %705 = vmatpush.msra.mxu0 %v536
    %706 = vmatpush.msra.mxu0 %v535
    %707 = vmatpush.msra.mxu0 %v534
    %708 = vmatmul.f32.gmra.mxu0 %v421
    %v709 = vpop.f32.mrf.mxu0
    %v710 = vadd.f32 %v690, %v709
    %711 = vdwg.mxu0
    %v712 = vld [vmem:[%s2 + $0x400] sm:$0xff]
    %v713 = vld [vmem:[%s2 + $0x408] sm:$0xff]
    %v714 = vld [vmem:[%s2 + $0x410] sm:$0xff]
    %v715 = vld [vmem:[%s2 + $0x418] sm:$0xff]
    %v716 = vld [vmem:[%s2 + $0x420] sm:$0xff]
    %v717 = vld [vmem:[%s2 + $0x428] sm:$0xff]
    %v718 = vld [vmem:[%s2 + $0x430] sm:$0xff]
    %v719 = vld [vmem:[%s2 + $0x438] sm:$0xff]
    %720 = vmatpush.msra.mxu0 0.0
    %721 = vmatpush.msra.mxu0 0.0
    %722 = vmatpush.msra.mxu0 0.0
    %723 = vmatpush.msra.mxu0 0.0
    %724 = vmatpush.msra.mxu0 0.0
    %725 = vmatpush.msra.mxu0 0.0
    %726 = vmatpush.msra.mxu0 0.0
    %727 = vmatpush.msra.mxu0 0.0
    %728 = vmatpush.msra.mxu0 0.0
    %729 = vmatpush.msra.mxu0 0.0
    %730 = vmatpush.msra.mxu0 0.0
    %731 = vmatpush.msra.mxu0 0.0
    %732 = vmatpush.msra.mxu0 %v719
    %733 = vmatpush.msra.mxu0 %v718
    %734 = vmatpush.msra.mxu0 %v717
    %735 = vmatpush.msra.mxu0 %v716
    %736 = vmatmul.f32.gmra.mxu0 %v252
    %v737 = vpop.f32.mrf.mxu0
    %v738 = vadd.f32 0.0, %v737
    %739 = vdwg.mxu0
    %740 = vmatpush.msra.mxu0 0.0
    %741 = vmatpush.msra.mxu0 0.0
    %742 = vmatpush.msra.mxu0 0.0
    %743 = vmatpush.msra.mxu0 0.0
    %744 = vmatpush.msra.mxu0 0.0
    %745 = vmatpush.msra.mxu0 0.0
    %746 = vmatpush.msra.mxu0 0.0
    %747 = vmatpush.msra.mxu0 0.0
    %748 = vmatpush.msra.mxu0 0.0
    %749 = vmatpush.msra.mxu0 0.0
    %750 = vmatpush.msra.mxu0 0.0
    %751 = vmatpush.msra.mxu0 0.0
    %752 = vmatpush.msra.mxu0 %v715
    %753 = vmatpush.msra.mxu0 %v714
    %754 = vmatpush.msra.mxu0 %v713
    %755 = vmatpush.msra.mxu0 %v712
    %756 = vmatmul.f32.gmra.mxu0 %v89
    %v757 = vpop.f32.mrf.mxu0
    %v758 = vadd.f32 %v738, %v757
    %759 = vdwg.mxu0
    %v760 = vld [vmem:[%s3] sm:$0x1]
    %v761 = vperm.slane %v760, 0
    %v762 = vadd.f32 %v758, %v761
    %v763 = vmax.f32 %v762, 0.0
    %v764 = vxor.u32 %v710, 2147483648
    %v765 = vmul.f32 %v764, 1.442695
    %v766 = vpow.pop %v765
    %v767 = vadd.f32 %v766, 1.0
    %v768 = vrcp.pop %v767
    %v769 = vmul.f32 %v767, %v768
    %v770 = vsub.f32 1.0, %v769
    %v771 = vmul.f32 %v768, %v770
    %v772 = vadd.f32 %v768, %v771
    %vm773 = vweird.f32 %v767
    %vm774 = vweird.f32 %v768
    %vm775 = vmor %vm773, %vm774
    %v776 = vsel %vm775, %v768, %v772
    %v777 = vand.u32 2147483647, %v767
    %vm778 = vcmp.eq.f32.partialorder %v777, 8.507059e+37
    %v779 = vand.u32 %v767, 2147483648
    %v780 = vor.u32 1.1754944e-38, %v779
    %v781 = vsel %vm778, %v780, %v776
    %v782 = vmul.f32 1.0, %v781
    %v783 = vmul.f32 %v782, %v763
    %v784 = vld [vmem:[%s2 + $0x440] sm:$0xff]
    %v785 = vld [vmem:[%s2 + $0x448] sm:$0xff]
    %v786 = vld [vmem:[%s2 + $0x450] sm:$0xff]
    %v787 = vld [vmem:[%s2 + $0x458] sm:$0xff]
    %v788 = vld [vmem:[%s2 + $0x460] sm:$0xff]
    %v789 = vld [vmem:[%s2 + $0x468] sm:$0xff]
    %v790 = vld [vmem:[%s2 + $0x470] sm:$0xff]
    %v791 = vld [vmem:[%s2 + $0x478] sm:$0xff]
    %v792 = vld [vmem:[%s3 + $0x2] sm:$0x1]
    %v793 = vperm.slane %v792, 0
    %vm794 = vcmask 523264
    %v796 = vsel %vm794, %v783, 0
    %798 = vmatpush.msra.mxu0 0.0
    %799 = vmatpush.msra.mxu0 0.0
    %800 = vmatpush.msra.mxu0 0.0
    %801 = vmatpush.msra.mxu0 0.0
    %802 = vmatpush.msra.mxu0 0.0
    %803 = vmatpush.msra.mxu0 0.0
    %804 = vmatpush.msra.mxu0 0.0
    %805 = vmatpush.msra.mxu0 0.0
    %806 = vmatpush.msra.mxu0 %v791
    %807 = vmatpush.msra.mxu0 %v790
    %808 = vmatpush.msra.mxu0 %v789
    %809 = vmatpush.msra.mxu0 %v788
    %810 = vmatpush.msra.mxu0 %v787
    %811 = vmatpush.msra.mxu0 %v786
    %812 = vmatpush.msra.mxu0 %v785
    %813 = vmatpush.msra.mxu0 %v784
    %814 = vmatmul.f32.gmra.mxu0 %v796
    %v815 = vpop.f32.mrf.mxu0
    %v816 = vadd.f32 %v793, %v815
    %817 = vdwg.mxu0
    %v818 = vmax.f32 %v816, 0.0
    %v820 = vsel %vm87, %v818, 0
    %822 = vmatpush.msra.mxu0 0.0
    %823 = vmatpush.msra.mxu0 0.0
    %824 = vmatpush.msra.mxu0 0.0
    %825 = vmatpush.msra.mxu0 0.0
    %826 = vmatpush.msra.mxu0 0.0
    %827 = vmatpush.msra.mxu0 0.0
    %828 = vmatpush.msra.mxu0 0.0
    %829 = vmatpush.msra.mxu0 0.0
    %830 = vmatpush.msra.mxu0 0.0
    %831 = vmatpush.msra.mxu0 0.0
    %832 = vmatpush.msra.mxu0 0.0
    %833 = vmatpush.msra.mxu0 0.0
    %834 = vmatpush.msra.mxu0 %v47
    %835 = vmatpush.msra.mxu0 %v39
    %836 = vmatpush.msra.mxu0 %v31
    %837 = vmatpush.msra.mxu0 %v23
    %838 = vmatmul.f32.gmra.mxu0 %v820
    %v839 = vpop.f32.mrf.mxu0
    %v840 = vadd.f32 0.0, %v839
    %841 = vdwg.mxu0
    %842 = vmatpush.msra.mxu0 0.0
    %843 = vmatpush.msra.mxu0 0.0
    %844 = vmatpush.msra.mxu0 0.0
    %845 = vmatpush.msra.mxu0 0.0
    %846 = vmatpush.msra.mxu0 0.0
    %847 = vmatpush.msra.mxu0 0.0
    %848 = vmatpush.msra.mxu0 0.0
    %849 = vmatpush.msra.mxu0 0.0
    %850 = vmatpush.msra.mxu0 0.0
    %851 = vmatpush.msra.mxu0 0.0
    %852 = vmatpush.msra.mxu0 0.0
    %853 = vmatpush.msra.mxu0 0.0
    %854 = vmatpush.msra.mxu0 %v48
    %855 = vmatpush.msra.mxu0 %v40
    %856 = vmatpush.msra.mxu0 %v32
    %857 = vmatpush.msra.mxu0 %v24
    %858 = vmatmul.f32.gmra.mxu0 %v820
    %v859 = vpop.f32.mrf.mxu0
    %v860 = vadd.f32 0.0, %v859
    %861 = vdwg.mxu0
    %862 = vmatpush.msra.mxu0 0.0
    %863 = vmatpush.msra.mxu0 0.0
    %864 = vmatpush.msra.mxu0 0.0
    %865 = vmatpush.msra.mxu0 0.0
    %866 = vmatpush.msra.mxu0 0.0
    %867 = vmatpush.msra.mxu0 0.0
    %868 = vmatpush.msra.mxu0 0.0
    %869 = vmatpush.msra.mxu0 0.0
    %870 = vmatpush.msra.mxu0 0.0
    %871 = vmatpush.msra.mxu0 0.0
    %872 = vmatpush.msra.mxu0 0.0
    %873 = vmatpush.msra.mxu0 0.0
    %874 = vmatpush.msra.mxu0 %v49
    %875 = vmatpush.msra.mxu0 %v41
    %876 = vmatpush.msra.mxu0 %v33
    %877 = vmatpush.msra.mxu0 %v25
    %878 = vmatmul.f32.gmra.mxu0 %v820
    %v879 = vpop.f32.mrf.mxu0
    %v880 = vadd.f32 0.0, %v879
    %881 = vdwg.mxu0
    %882 = vmatpush.msra.mxu0 0.0
    %883 = vmatpush.msra.mxu0 0.0
    %884 = vmatpush.msra.mxu0 0.0
    %885 = vmatpush.msra.mxu0 0.0
    %886 = vmatpush.msra.mxu0 0.0
    %887 = vmatpush.msra.mxu0 0.0
    %888 = vmatpush.msra.mxu0 0.0
    %889 = vmatpush.msra.mxu0 0.0
    %890 = vmatpush.msra.mxu0 0.0
    %891 = vmatpush.msra.mxu0 0.0
    %892 = vmatpush.msra.mxu0 0.0
    %893 = vmatpush.msra.mxu0 0.0
    %894 = vmatpush.msra.mxu0 %v50
    %895 = vmatpush.msra.mxu0 %v42
    %896 = vmatpush.msra.mxu0 %v34
    %897 = vmatpush.msra.mxu0 %v26
    %898 = vmatmul.f32.gmra.mxu0 %v820
    %v899 = vpop.f32.mrf.mxu0
    %v900 = vadd.f32 0.0, %v899
    %901 = vdwg.mxu0
    %902 = vmatpush.msra.mxu0 0.0
    %903 = vmatpush.msra.mxu0 0.0
    %904 = vmatpush.msra.mxu0 0.0
    %905 = vmatpush.msra.mxu0 0.0
    %906 = vmatpush.msra.mxu0 0.0
    %907 = vmatpush.msra.mxu0 0.0
    %908 = vmatpush.msra.mxu0 0.0
    %909 = vmatpush.msra.mxu0 0.0
    %910 = vmatpush.msra.mxu0 0.0
    %911 = vmatpush.msra.mxu0 0.0
    %912 = vmatpush.msra.mxu0 0.0
    %913 = vmatpush.msra.mxu0 0.0
    %914 = vmatpush.msra.mxu0 %v51
    %915 = vmatpush.msra.mxu0 %v43
    %916 = vmatpush.msra.mxu0 %v35
    %917 = vmatpush.msra.mxu0 %v27
    %918 = vmatmul.f32.gmra.mxu0 %v820
    %v919 = vpop.f32.mrf.mxu0
    %v920 = vadd.f32 0.0, %v919
    %921 = vdwg.mxu0
    %922 = vmatpush.msra.mxu0 0.0
    %923 = vmatpush.msra.mxu0 0.0
    %924 = vmatpush.msra.mxu0 0.0
    %925 = vmatpush.msra.mxu0 0.0
    %926 = vmatpush.msra.mxu0 0.0
    %927 = vmatpush.msra.mxu0 0.0
    %928 = vmatpush.msra.mxu0 0.0
    %929 = vmatpush.msra.mxu0 0.0
    %930 = vmatpush.msra.mxu0 0.0
    %931 = vmatpush.msra.mxu0 0.0
    %932 = vmatpush.msra.mxu0 0.0
    %933 = vmatpush.msra.mxu0 0.0
    %934 = vmatpush.msra.mxu0 %v52
    %935 = vmatpush.msra.mxu0 %v44
    %936 = vmatpush.msra.mxu0 %v36
    %937 = vmatpush.msra.mxu0 %v28
    %938 = vmatmul.f32.gmra.mxu0 %v820
    %v939 = vpop.f32.mrf.mxu0
    %v940 = vadd.f32 0.0, %v939
    %941 = vdwg.mxu0
    %942 = vmatpush.msra.mxu0 0.0
    %943 = vmatpush.msra.mxu0 0.0
    %944 = vmatpush.msra.mxu0 0.0
    %945 = vmatpush.msra.mxu0 0.0
    %946 = vmatpush.msra.mxu0 0.0
    %947 = vmatpush.msra.mxu0 0.0
    %948 = vmatpush.msra.mxu0 0.0
    %949 = vmatpush.msra.mxu0 0.0
    %950 = vmatpush.msra.mxu0 0.0
    %951 = vmatpush.msra.mxu0 0.0
    %952 = vmatpush.msra.mxu0 0.0
    %953 = vmatpush.msra.mxu0 0.0
    %954 = vmatpush.msra.mxu0 %v53
    %955 = vmatpush.msra.mxu0 %v45
    %956 = vmatpush.msra.mxu0 %v37
    %957 = vmatpush.msra.mxu0 %v29
    %958 = vmatmul.f32.gmra.mxu0 %v820
    %v959 = vpop.f32.mrf.mxu0
    %v960 = vadd.f32 0.0, %v959
    %961 = vdwg.mxu0
    %962 = vmatpush.msra.mxu0 0.0
    %963 = vmatpush.msra.mxu0 0.0
    %964 = vmatpush.msra.mxu0 0.0
    %965 = vmatpush.msra.mxu0 0.0
    %966 = vmatpush.msra.mxu0 0.0
    %967 = vmatpush.msra.mxu0 0.0
    %968 = vmatpush.msra.mxu0 0.0
    %969 = vmatpush.msra.mxu0 0.0
    %970 = vmatpush.msra.mxu0 0.0
    %971 = vmatpush.msra.mxu0 0.0
    %972 = vmatpush.msra.mxu0 0.0
    %973 = vmatpush.msra.mxu0 0.0
    %974 = vmatpush.msra.mxu0 %v54
    %975 = vmatpush.msra.mxu0 %v46
    %976 = vmatpush.msra.mxu0 %v38
    %977 = vmatpush.msra.mxu0 %v30
    %978 = vmatmul.f32.gmra.mxu0 %v820
    %v979 = vpop.f32.mrf.mxu0
    %v980 = vadd.f32 0.0, %v979
    %981 = vdwg.mxu0
    %982 = vrot.lane.b32.xlu0 %v818, 96
    %v983 = vpop.permute.xlu0 %982
    %v984 = vsel %vm87, %v983, 0
    %986 = vmatpush.msra.mxu0 0.0
    %987 = vmatpush.msra.mxu0 0.0
    %988 = vmatpush.msra.mxu0 0.0
    %989 = vmatpush.msra.mxu0 0.0
    %990 = vmatpush.msra.mxu0 0.0
    %991 = vmatpush.msra.mxu0 0.0
    %992 = vmatpush.msra.mxu0 0.0
    %993 = vmatpush.msra.mxu0 0.0
    %994 = vmatpush.msra.mxu0 0.0
    %995 = vmatpush.msra.mxu0 0.0
    %996 = vmatpush.msra.mxu0 0.0
    %997 = vmatpush.msra.mxu0 0.0
    %998 = vmatpush.msra.mxu0 %v79
    %999 = vmatpush.msra.mxu0 %v71
    %1000 = vmatpush.msra.mxu0 %v63
    %1001 = vmatpush.msra.mxu0 %v55
    %1002 = vmatmul.f32.gmra.mxu0 %v984
    %v1003 = vpop.f32.mrf.mxu0
    %v1004 = vadd.f32 0.0, %v1003
    %1005 = vdwg.mxu0
    %1006 = vmatpush.msra.mxu0 0.0
    %1007 = vmatpush.msra.mxu0 0.0
    %1008 = vmatpush.msra.mxu0 0.0
    %1009 = vmatpush.msra.mxu0 0.0
    %1010 = vmatpush.msra.mxu0 0.0
    %1011 = vmatpush.msra.mxu0 0.0
    %1012 = vmatpush.msra.mxu0 0.0
    %1013 = vmatpush.msra.mxu0 0.0
    %1014 = vmatpush.msra.mxu0 0.0
    %1015 = vmatpush.msra.mxu0 0.0
    %1016 = vmatpush.msra.mxu0 0.0
    %1017 = vmatpush.msra.mxu0 0.0
    %1018 = vmatpush.msra.mxu0 %v80
    %1019 = vmatpush.msra.mxu0 %v72
    %1020 = vmatpush.msra.mxu0 %v64
    %1021 = vmatpush.msra.mxu0 %v56
    %1022 = vmatmul.f32.gmra.mxu0 %v984
    %v1023 = vpop.f32.mrf.mxu0
    %v1024 = vadd.f32 0.0, %v1023
    %1025 = vdwg.mxu0
    %1026 = vmatpush.msra.mxu0 0.0
    %1027 = vmatpush.msra.mxu0 0.0
    %1028 = vmatpush.msra.mxu0 0.0
    %1029 = vmatpush.msra.mxu0 0.0
    %1030 = vmatpush.msra.mxu0 0.0
    %1031 = vmatpush.msra.mxu0 0.0
    %1032 = vmatpush.msra.mxu0 0.0
    %1033 = vmatpush.msra.mxu0 0.0
    %1034 = vmatpush.msra.mxu0 0.0
    %1035 = vmatpush.msra.mxu0 0.0
    %1036 = vmatpush.msra.mxu0 0.0
    %1037 = vmatpush.msra.mxu0 0.0
    %1038 = vmatpush.msra.mxu0 %v81
    %1039 = vmatpush.msra.mxu0 %v73
    %1040 = vmatpush.msra.mxu0 %v65
    %1041 = vmatpush.msra.mxu0 %v57
    %1042 = vmatmul.f32.gmra.mxu0 %v984
    %v1043 = vpop.f32.mrf.mxu0
    %v1044 = vadd.f32 0.0, %v1043
    %1045 = vdwg.mxu0
    %1046 = vmatpush.msra.mxu0 0.0
    %1047 = vmatpush.msra.mxu0 0.0
    %1048 = vmatpush.msra.mxu0 0.0
    %1049 = vmatpush.msra.mxu0 0.0
    %1050 = vmatpush.msra.mxu0 0.0
    %1051 = vmatpush.msra.mxu0 0.0
    %1052 = vmatpush.msra.mxu0 0.0
    %1053 = vmatpush.msra.mxu0 0.0
    %1054 = vmatpush.msra.mxu0 0.0
    %1055 = vmatpush.msra.mxu0 0.0
    %1056 = vmatpush.msra.mxu0 0.0
    %1057 = vmatpush.msra.mxu0 0.0
    %1058 = vmatpush.msra.mxu0 %v82
    %1059 = vmatpush.msra.mxu0 %v74
    %1060 = vmatpush.msra.mxu0 %v66
    %1061 = vmatpush.msra.mxu0 %v58
    %1062 = vmatmul.f32.gmra.mxu0 %v984
    %v1063 = vpop.f32.mrf.mxu0
    %v1064 = vadd.f32 0.0, %v1063
    %1065 = vdwg.mxu0
    %1066 = vmatpush.msra.mxu0 0.0
    %1067 = vmatpush.msra.mxu0 0.0
    %1068 = vmatpush.msra.mxu0 0.0
    %1069 = vmatpush.msra.mxu0 0.0
    %1070 = vmatpush.msra.mxu0 0.0
    %1071 = vmatpush.msra.mxu0 0.0
    %1072 = vmatpush.msra.mxu0 0.0
    %1073 = vmatpush.msra.mxu0 0.0
    %1074 = vmatpush.msra.mxu0 0.0
    %1075 = vmatpush.msra.mxu0 0.0
    %1076 = vmatpush.msra.mxu0 0.0
    %1077 = vmatpush.msra.mxu0 0.0
    %1078 = vmatpush.msra.mxu0 %v83
    %1079 = vmatpush.msra.mxu0 %v75
    %1080 = vmatpush.msra.mxu0 %v67
    %1081 = vmatpush.msra.mxu0 %v59
    %1082 = vmatmul.f32.gmra.mxu0 %v984
    %v1083 = vpop.f32.mrf.mxu0
    %v1084 = vadd.f32 0.0, %v1083
    %1085 = vdwg.mxu0
    %1086 = vmatpush.msra.mxu0 0.0
    %1087 = vmatpush.msra.mxu0 0.0
    %1088 = vmatpush.msra.mxu0 0.0
    %1089 = vmatpush.msra.mxu0 0.0
    %1090 = vmatpush.msra.mxu0 0.0
    %1091 = vmatpush.msra.mxu0 0.0
    %1092 = vmatpush.msra.mxu0 0.0
    %1093 = vmatpush.msra.mxu0 0.0
    %1094 = vmatpush.msra.mxu0 0.0
    %1095 = vmatpush.msra.mxu0 0.0
    %1096 = vmatpush.msra.mxu0 0.0
    %1097 = vmatpush.msra.mxu0 0.0
    %1098 = vmatpush.msra.mxu0 %v84
    %1099 = vmatpush.msra.mxu0 %v76
    %1100 = vmatpush.msra.mxu0 %v68
    %1101 = vmatpush.msra.mxu0 %v60
    %1102 = vmatmul.f32.gmra.mxu0 %v984
    %v1103 = vpop.f32.mrf.mxu0
    %v1104 = vadd.f32 0.0, %v1103
    %1105 = vdwg.mxu0
    %1106 = vmatpush.msra.mxu0 0.0
    %1107 = vmatpush.msra.mxu0 0.0
    %1108 = vmatpush.msra.mxu0 0.0
    %1109 = vmatpush.msra.mxu0 0.0
    %1110 = vmatpush.msra.mxu0 0.0
    %1111 = vmatpush.msra.mxu0 0.0
    %1112 = vmatpush.msra.mxu0 0.0
    %1113 = vmatpush.msra.mxu0 0.0
    %1114 = vmatpush.msra.mxu0 0.0
    %1115 = vmatpush.msra.mxu0 0.0
    %1116 = vmatpush.msra.mxu0 0.0
    %1117 = vmatpush.msra.mxu0 0.0
    %1118 = vmatpush.msra.mxu0 %v85
    %1119 = vmatpush.msra.mxu0 %v77
    %1120 = vmatpush.msra.mxu0 %v69
    %1121 = vmatpush.msra.mxu0 %v61
    %1122 = vmatmul.f32.gmra.mxu0 %v984
    %v1123 = vpop.f32.mrf.mxu0
    %v1124 = vadd.f32 0.0, %v1123
    %1125 = vdwg.mxu0
    %1126 = vmatpush.msra.mxu0 0.0
    %1127 = vmatpush.msra.mxu0 0.0
    %1128 = vmatpush.msra.mxu0 0.0
    %1129 = vmatpush.msra.mxu0 0.0
    %1130 = vmatpush.msra.mxu0 0.0
    %1131 = vmatpush.msra.mxu0 0.0
    %1132 = vmatpush.msra.mxu0 0.0
    %1133 = vmatpush.msra.mxu0 0.0
    %1134 = vmatpush.msra.mxu0 0.0
    %1135 = vmatpush.msra.mxu0 0.0
    %1136 = vmatpush.msra.mxu0 0.0
    %1137 = vmatpush.msra.mxu0 0.0
    %1138 = vmatpush.msra.mxu0 %v86
    %1139 = vmatpush.msra.mxu0 %v78
    %1140 = vmatpush.msra.mxu0 %v70
    %1141 = vmatpush.msra.mxu0 %v62
    %1142 = vmatmul.f32.gmra.mxu0 %v984
    %v1143 = vpop.f32.mrf.mxu0
    %v1144 = vadd.f32 0.0, %v1143
    %1145 = vdwg.mxu0
    %v1146 = vmul.f32 %v840, %v1004
    %v1147 = vmul.f32 %v860, %v1024
    %v1148 = vmul.f32 %v880, %v1044
    %v1149 = vmul.f32 %v900, %v1064
    %v1150 = vmul.f32 %v920, %v1084
    %v1151 = vmul.f32 %v940, %v1104
    %v1152 = vmul.f32 %v960, %v1124
    %v1153 = vmul.f32 %v980, %v1144
    %v1154 = vld [vmem:[%s2 + $0x480] sm:$0xff]
    %v1155 = vld [vmem:[%s2 + $0x488] sm:$0xff]
    %v1156 = vld [vmem:[%s2 + $0x490] sm:$0xff]
    %v1157 = vld [vmem:[%s2 + $0x498] sm:$0xff]
    %v1158 = vld [vmem:[%s2 + $0x4a0] sm:$0xff]
    %v1159 = vld [vmem:[%s2 + $0x4a8] sm:$0xff]
    %v1160 = vld [vmem:[%s2 + $0x4b0] sm:$0xff]
    %v1161 = vld [vmem:[%s2 + $0x4b8] sm:$0xff]
    %v1162 = vld [vmem:[%s2 + $0x4c0] sm:$0xff]
    %v1163 = vld [vmem:[%s2 + $0x4c8] sm:$0xff]
    %v1164 = vld [vmem:[%s2 + $0x4d0] sm:$0xff]
    %v1165 = vld [vmem:[%s2 + $0x4d8] sm:$0xff]
    %v1166 = vld [vmem:[%s2 + $0x4e0] sm:$0xff]
    %v1167 = vld [vmem:[%s2 + $0x4e8] sm:$0xff]
    %v1168 = vld [vmem:[%s2 + $0x4f0] sm:$0xff]
    %v1169 = vld [vmem:[%s2 + $0x4f8] sm:$0xff]
    %v1170 = vld [vmem:[%s2 + $0x500] sm:$0xff]
    %v1171 = vld [vmem:[%s2 + $0x508] sm:$0xff]
    %v1172 = vld [vmem:[%s2 + $0x510] sm:$0xff]
    %v1173 = vld [vmem:[%s2 + $0x518] sm:$0xff]
    %v1174 = vld [vmem:[%s2 + $0x520] sm:$0xff]
    %v1175 = vld [vmem:[%s2 + $0x528] sm:$0xff]
    %v1176 = vld [vmem:[%s2 + $0x530] sm:$0xff]
    %v1177 = vld [vmem:[%s2 + $0x538] sm:$0xff]
    %v1178 = vld [vmem:[%s2 + $0x540] sm:$0xff]
    %v1179 = vld [vmem:[%s2 + $0x548] sm:$0xff]
    %v1180 = vld [vmem:[%s2 + $0x550] sm:$0xff]
    %v1181 = vld [vmem:[%s2 + $0x558] sm:$0xff]
    %v1182 = vld [vmem:[%s2 + $0x560] sm:$0xff]
    %v1183 = vld [vmem:[%s2 + $0x568] sm:$0xff]
    %v1184 = vld [vmem:[%s2 + $0x570] sm:$0xff]
    %v1185 = vld [vmem:[%s2 + $0x578] sm:$0xff]
    %v1186 = vld [vmem:[%s2 + $0x580] sm:$0xff]
    %v1187 = vld [vmem:[%s2 + $0x588] sm:$0xff]
    %v1188 = vld [vmem:[%s2 + $0x590] sm:$0xff]
    %v1189 = vld [vmem:[%s2 + $0x598] sm:$0xff]
    %v1190 = vld [vmem:[%s2 + $0x5a0] sm:$0xff]
    %v1191 = vld [vmem:[%s2 + $0x5a8] sm:$0xff]
    %v1192 = vld [vmem:[%s2 + $0x5b0] sm:$0xff]
    %v1193 = vld [vmem:[%s2 + $0x5b8] sm:$0xff]
    %v1194 = vld [vmem:[%s2 + $0x5c0] sm:$0xff]
    %v1195 = vld [vmem:[%s2 + $0x5c8] sm:$0xff]
    %v1196 = vld [vmem:[%s2 + $0x5d0] sm:$0xff]
    %v1197 = vld [vmem:[%s2 + $0x5d8] sm:$0xff]
    %v1198 = vld [vmem:[%s2 + $0x5e0] sm:$0xff]
    %v1199 = vld [vmem:[%s2 + $0x5e8] sm:$0xff]
    %v1200 = vld [vmem:[%s2 + $0x5f0] sm:$0xff]
    %v1201 = vld [vmem:[%s2 + $0x5f8] sm:$0xff]
    %v1202 = vld [vmem:[%s2 + $0x600] sm:$0xff]
    %v1203 = vld [vmem:[%s2 + $0x608] sm:$0xff]
    %v1204 = vld [vmem:[%s2 + $0x610] sm:$0xff]
    %v1205 = vld [vmem:[%s2 + $0x618] sm:$0xff]
    %v1206 = vld [vmem:[%s2 + $0x620] sm:$0xff]
    %v1207 = vld [vmem:[%s2 + $0x628] sm:$0xff]
    %v1208 = vld [vmem:[%s2 + $0x630] sm:$0xff]
    %v1209 = vld [vmem:[%s2 + $0x638] sm:$0xff]
    %v1210 = vld [vmem:[%s2 + $0x640] sm:$0xff]
    %v1211 = vld [vmem:[%s2 + $0x648] sm:$0xff]
    %v1212 = vld [vmem:[%s2 + $0x650] sm:$0xff]
    %v1213 = vld [vmem:[%s2 + $0x658] sm:$0xff]
    %v1214 = vld [vmem:[%s2 + $0x660] sm:$0xff]
    %v1215 = vld [vmem:[%s2 + $0x668] sm:$0xff]
    %v1216 = vld [vmem:[%s2 + $0x670] sm:$0xff]
    %v1217 = vld [vmem:[%s2 + $0x678] sm:$0xff]
    %v1218 = vld [vmem:[%s2 + $0x680] sm:$0xff]
    %v1219 = vld [vmem:[%s2 + $0x688] sm:$0xff]
    %v1220 = vld [vmem:[%s2 + $0x690] sm:$0xff]
    %v1221 = vld [vmem:[%s2 + $0x698] sm:$0xff]
    %v1222 = vld [vmem:[%s2 + $0x6a0] sm:$0xff]
    %v1223 = vld [vmem:[%s2 + $0x6a8] sm:$0xff]
    %v1224 = vld [vmem:[%s2 + $0x6b0] sm:$0xff]
    %v1225 = vld [vmem:[%s2 + $0x6b8] sm:$0xff]
    %v1226 = vld [vmem:[%s2 + $0x6c0] sm:$0xff]
    %v1227 = vld [vmem:[%s2 + $0x6c8] sm:$0xff]
    %v1228 = vld [vmem:[%s2 + $0x6d0] sm:$0xff]
    %v1229 = vld [vmem:[%s2 + $0x6d8] sm:$0xff]
    %v1230 = vld [vmem:[%s2 + $0x6e0] sm:$0xff]
    %v1231 = vld [vmem:[%s2 + $0x6e8] sm:$0xff]
    %v1232 = vld [vmem:[%s2 + $0x6f0] sm:$0xff]
    %v1233 = vld [vmem:[%s2 + $0x6f8] sm:$0xff]
    %v1234 = vld [vmem:[%s2 + $0x700] sm:$0xff]
    %v1235 = vld [vmem:[%s2 + $0x708] sm:$0xff]
    %v1236 = vld [vmem:[%s2 + $0x710] sm:$0xff]
    %v1237 = vld [vmem:[%s2 + $0x718] sm:$0xff]
    %v1238 = vld [vmem:[%s2 + $0x720] sm:$0xff]
    %v1239 = vld [vmem:[%s2 + $0x728] sm:$0xff]
    %v1240 = vld [vmem:[%s2 + $0x730] sm:$0xff]
    %v1241 = vld [vmem:[%s2 + $0x738] sm:$0xff]
    %v1242 = vld [vmem:[%s2 + $0x740] sm:$0xff]
    %v1243 = vld [vmem:[%s2 + $0x748] sm:$0xff]
    %v1244 = vld [vmem:[%s2 + $0x750] sm:$0xff]
    %v1245 = vld [vmem:[%s2 + $0x758] sm:$0xff]
    %v1246 = vld [vmem:[%s2 + $0x760] sm:$0xff]
    %v1247 = vld [vmem:[%s2 + $0x768] sm:$0xff]
    %v1248 = vld [vmem:[%s2 + $0x770] sm:$0xff]
    %v1249 = vld [vmem:[%s2 + $0x778] sm:$0xff]
    %v1250 = vld [vmem:[%s2 + $0x780] sm:$0xff]
    %v1251 = vld [vmem:[%s2 + $0x788] sm:$0xff]
    %v1252 = vld [vmem:[%s2 + $0x790] sm:$0xff]
    %v1253 = vld [vmem:[%s2 + $0x798] sm:$0xff]
    %v1254 = vld [vmem:[%s2 + $0x7a0] sm:$0xff]
    %v1255 = vld [vmem:[%s2 + $0x7a8] sm:$0xff]
    %v1256 = vld [vmem:[%s2 + $0x7b0] sm:$0xff]
    %v1257 = vld [vmem:[%s2 + $0x7b8] sm:$0xff]
    %v1258 = vld [vmem:[%s2 + $0x7c0] sm:$0xff]
    %v1259 = vld [vmem:[%s2 + $0x7c8] sm:$0xff]
    %v1260 = vld [vmem:[%s2 + $0x7d0] sm:$0xff]
    %v1261 = vld [vmem:[%s2 + $0x7d8] sm:$0xff]
    %v1262 = vld [vmem:[%s2 + $0x7e0] sm:$0xff]
    %v1263 = vld [vmem:[%s2 + $0x7e8] sm:$0xff]
    %v1264 = vld [vmem:[%s2 + $0x7f0] sm:$0xff]
    %v1265 = vld [vmem:[%s2 + $0x7f8] sm:$0xff]
    %v1266 = vld [vmem:[%s2 + $0x800] sm:$0xff]
    %v1267 = vld [vmem:[%s2 + $0x808] sm:$0xff]
    %v1268 = vld [vmem:[%s2 + $0x810] sm:$0xff]
    %v1269 = vld [vmem:[%s2 + $0x818] sm:$0xff]
    %v1270 = vld [vmem:[%s2 + $0x820] sm:$0xff]
    %v1271 = vld [vmem:[%s2 + $0x828] sm:$0xff]
    %v1272 = vld [vmem:[%s2 + $0x830] sm:$0xff]
    %v1273 = vld [vmem:[%s2 + $0x838] sm:$0xff]
    %v1274 = vld [vmem:[%s2 + $0x840] sm:$0xff]
    %v1275 = vld [vmem:[%s2 + $0x848] sm:$0xff]
    %v1276 = vld [vmem:[%s2 + $0x850] sm:$0xff]
    %v1277 = vld [vmem:[%s2 + $0x858] sm:$0xff]
    %v1278 = vld [vmem:[%s2 + $0x860] sm:$0xff]
    %v1279 = vld [vmem:[%s2 + $0x868] sm:$0xff]
    %v1280 = vld [vmem:[%s2 + $0x870] sm:$0xff]
    %v1281 = vld [vmem:[%s2 + $0x878] sm:$0xff]
    %v1282 = vld [vmem:[%s2 + $0x880] sm:$0xff]
    %v1283 = vld [vmem:[%s2 + $0x888] sm:$0xff]
    %v1284 = vld [vmem:[%s2 + $0x890] sm:$0xff]
    %v1285 = vld [vmem:[%s2 + $0x898] sm:$0xff]
    %v1286 = vld [vmem:[%s2 + $0x8a0] sm:$0xff]
    %v1287 = vld [vmem:[%s2 + $0x8a8] sm:$0xff]
    %v1288 = vld [vmem:[%s2 + $0x8b0] sm:$0xff]
    %v1289 = vld [vmem:[%s2 + $0x8b8] sm:$0xff]
    %v1290 = vsel %vm794, %v818, 0
    %1292 = vmatpush.msra.mxu0 0.0
    %1293 = vmatpush.msra.mxu0 0.0
    %1294 = vmatpush.msra.mxu0 0.0
    %1295 = vmatpush.msra.mxu0 0.0
    %1296 = vmatpush.msra.mxu0 0.0
    %1297 = vmatpush.msra.mxu0 0.0
    %1298 = vmatpush.msra.mxu0 0.0
    %1299 = vmatpush.msra.mxu0 0.0
    %1300 = vmatpush.msra.mxu0 %v1289
    %1301 = vmatpush.msra.mxu0 %v1288
    %1302 = vmatpush.msra.mxu0 %v1287
    %1303 = vmatpush.msra.mxu0 %v1286
    %1304 = vmatpush.msra.mxu0 %v1285
    %1305 = vmatpush.msra.mxu0 %v1284
    %1306 = vmatpush.msra.mxu0 %v1283
    %1307 = vmatpush.msra.mxu0 %v1282
    %1308 = vmatmul.f32.gmra.mxu0 %v1290
    %v1309 = vpop.f32.mrf.mxu0
    %v1310 = vadd.f32 0.0, %v1309
    %1311 = vdwg.mxu0
    %1312 = vmatpush.msra.mxu0 %v1169
    %1313 = vmatpush.msra.mxu0 %v1168
    %1314 = vmatpush.msra.mxu0 %v1167
    %1315 = vmatpush.msra.mxu0 %v1166
    %1316 = vmatpush.msra.mxu0 %v1165
    %1317 = vmatpush.msra.mxu0 %v1164
    %1318 = vmatpush.msra.mxu0 %v1163
    %1319 = vmatpush.msra.mxu0 %v1162
    %1320 = vmatpush.msra.mxu0 %v1161
    %1321 = vmatpush.msra.mxu0 %v1160
    %1322 = vmatpush.msra.mxu0 %v1159
    %1323 = vmatpush.msra.mxu0 %v1158
    %1324 = vmatpush.msra.mxu0 %v1157
    %1325 = vmatpush.msra.mxu0 %v1156
    %1326 = vmatpush.msra.mxu0 %v1155
    %1327 = vmatpush.msra.mxu0 %v1154
    %1328 = vmatmul.f32.gmra.mxu0 %v1146
    %v1329 = vpop.f32.mrf.mxu0
    %v1330 = vadd.f32 %v1310, %v1329
    %1331 = vdwg.mxu0
    %1332 = vmatpush.msra.mxu0 %v1185
    %1333 = vmatpush.msra.mxu0 %v1184
    %1334 = vmatpush.msra.mxu0 %v1183
    %1335 = vmatpush.msra.mxu0 %v1182
    %1336 = vmatpush.msra.mxu0 %v1181
    %1337 = vmatpush.msra.mxu0 %v1180
    %1338 = vmatpush.msra.mxu0 %v1179
    %1339 = vmatpush.msra.mxu0 %v1178
    %1340 = vmatpush.msra.mxu0 %v1177
    %1341 = vmatpush.msra.mxu0 %v1176
    %1342 = vmatpush.msra.mxu0 %v1175
    %1343 = vmatpush.msra.mxu0 %v1174
    %1344 = vmatpush.msra.mxu0 %v1173
    %1345 = vmatpush.msra.mxu0 %v1172
    %1346 = vmatpush.msra.mxu0 %v1171
    %1347 = vmatpush.msra.mxu0 %v1170
    %1348 = vmatmul.f32.gmra.mxu0 %v1147
    %v1349 = vpop.f32.mrf.mxu0
    %v1350 = vadd.f32 %v1330, %v1349
    %1351 = vdwg.mxu0
    %1352 = vmatpush.msra.mxu0 %v1201
    %1353 = vmatpush.msra.mxu0 %v1200
    %1354 = vmatpush.msra.mxu0 %v1199
    %1355 = vmatpush.msra.mxu0 %v1198
    %1356 = vmatpush.msra.mxu0 %v1197
    %1357 = vmatpush.msra.mxu0 %v1196
    %1358 = vmatpush.msra.mxu0 %v1195
    %1359 = vmatpush.msra.mxu0 %v1194
    %1360 = vmatpush.msra.mxu0 %v1193
    %1361 = vmatpush.msra.mxu0 %v1192
    %1362 = vmatpush.msra.mxu0 %v1191
    %1363 = vmatpush.msra.mxu0 %v1190
    %1364 = vmatpush.msra.mxu0 %v1189
    %1365 = vmatpush.msra.mxu0 %v1188
    %1366 = vmatpush.msra.mxu0 %v1187
    %1367 = vmatpush.msra.mxu0 %v1186
    %1368 = vmatmul.f32.gmra.mxu0 %v1148
    %v1369 = vpop.f32.mrf.mxu0
    %v1370 = vadd.f32 %v1350, %v1369
    %1371 = vdwg.mxu0
    %1372 = vmatpush.msra.mxu0 %v1217
    %1373 = vmatpush.msra.mxu0 %v1216
    %1374 = vmatpush.msra.mxu0 %v1215
    %1375 = vmatpush.msra.mxu0 %v1214
    %1376 = vmatpush.msra.mxu0 %v1213
    %1377 = vmatpush.msra.mxu0 %v1212
    %1378 = vmatpush.msra.mxu0 %v1211
    %1379 = vmatpush.msra.mxu0 %v1210
    %1380 = vmatpush.msra.mxu0 %v1209
    %1381 = vmatpush.msra.mxu0 %v1208
    %1382 = vmatpush.msra.mxu0 %v1207
    %1383 = vmatpush.msra.mxu0 %v1206
    %1384 = vmatpush.msra.mxu0 %v1205
    %1385 = vmatpush.msra.mxu0 %v1204
    %1386 = vmatpush.msra.mxu0 %v1203
    %1387 = vmatpush.msra.mxu0 %v1202
    %1388 = vmatmul.f32.gmra.mxu0 %v1149
    %v1389 = vpop.f32.mrf.mxu0
    %v1390 = vadd.f32 %v1370, %v1389
    %1391 = vdwg.mxu0
    %1392 = vmatpush.msra.mxu0 %v1233
    %1393 = vmatpush.msra.mxu0 %v1232
    %1394 = vmatpush.msra.mxu0 %v1231
    %1395 = vmatpush.msra.mxu0 %v1230
    %1396 = vmatpush.msra.mxu0 %v1229
    %1397 = vmatpush.msra.mxu0 %v1228
    %1398 = vmatpush.msra.mxu0 %v1227
    %1399 = vmatpush.msra.mxu0 %v1226
    %1400 = vmatpush.msra.mxu0 %v1225
    %1401 = vmatpush.msra.mxu0 %v1224
    %1402 = vmatpush.msra.mxu0 %v1223
    %1403 = vmatpush.msra.mxu0 %v1222
    %1404 = vmatpush.msra.mxu0 %v1221
    %1405 = vmatpush.msra.mxu0 %v1220
    %1406 = vmatpush.msra.mxu0 %v1219
    %1407 = vmatpush.msra.mxu0 %v1218
    %1408 = vmatmul.f32.gmra.mxu0 %v1150
    %v1409 = vpop.f32.mrf.mxu0
    %v1410 = vadd.f32 %v1390, %v1409
    %1411 = vdwg.mxu0
    %1412 = vmatpush.msra.mxu0 %v1249
    %1413 = vmatpush.msra.mxu0 %v1248
    %1414 = vmatpush.msra.mxu0 %v1247
    %1415 = vmatpush.msra.mxu0 %v1246
    %1416 = vmatpush.msra.mxu0 %v1245
    %1417 = vmatpush.msra.mxu0 %v1244
    %1418 = vmatpush.msra.mxu0 %v1243
    %1419 = vmatpush.msra.mxu0 %v1242
    %1420 = vmatpush.msra.mxu0 %v1241
    %1421 = vmatpush.msra.mxu0 %v1240
    %1422 = vmatpush.msra.mxu0 %v1239
    %1423 = vmatpush.msra.mxu0 %v1238
    %1424 = vmatpush.msra.mxu0 %v1237
    %1425 = vmatpush.msra.mxu0 %v1236
    %1426 = vmatpush.msra.mxu0 %v1235
    %1427 = vmatpush.msra.mxu0 %v1234
    %1428 = vmatmul.f32.gmra.mxu0 %v1151
    %v1429 = vpop.f32.mrf.mxu0
    %v1430 = vadd.f32 %v1410, %v1429
    %1431 = vdwg.mxu0
    %1432 = vmatpush.msra.mxu0 %v1265
    %1433 = vmatpush.msra.mxu0 %v1264
    %1434 = vmatpush.msra.mxu0 %v1263
    %1435 = vmatpush.msra.mxu0 %v1262
    %1436 = vmatpush.msra.mxu0 %v1261
    %1437 = vmatpush.msra.mxu0 %v1260
    %1438 = vmatpush.msra.mxu0 %v1259
    %1439 = vmatpush.msra.mxu0 %v1258
    %1440 = vmatpush.msra.mxu0 %v1257
    %1441 = vmatpush.msra.mxu0 %v1256
    %1442 = vmatpush.msra.mxu0 %v1255
    %1443 = vmatpush.msra.mxu0 %v1254
    %1444 = vmatpush.msra.mxu0 %v1253
    %1445 = vmatpush.msra.mxu0 %v1252
    %1446 = vmatpush.msra.mxu0 %v1251
    %1447 = vmatpush.msra.mxu0 %v1250
    %1448 = vmatmul.f32.gmra.mxu0 %v1152
    %v1449 = vpop.f32.mrf.mxu0
    %v1450 = vadd.f32 %v1430, %v1449
    %1451 = vdwg.mxu0
    %1452 = vmatpush.msra.mxu0 %v1281
    %1453 = vmatpush.msra.mxu0 %v1280
    %1454 = vmatpush.msra.mxu0 %v1279
    %1455 = vmatpush.msra.mxu0 %v1278
    %1456 = vmatpush.msra.mxu0 %v1277
    %1457 = vmatpush.msra.mxu0 %v1276
    %1458 = vmatpush.msra.mxu0 %v1275
    %1459 = vmatpush.msra.mxu0 %v1274
    %1460 = vmatpush.msra.mxu0 %v1273
    %1461 = vmatpush.msra.mxu0 %v1272
    %1462 = vmatpush.msra.mxu0 %v1271
    %1463 = vmatpush.msra.mxu0 %v1270
    %1464 = vmatpush.msra.mxu0 %v1269
    %1465 = vmatpush.msra.mxu0 %v1268
    %1466 = vmatpush.msra.mxu0 %v1267
    %1467 = vmatpush.msra.mxu0 %v1266
    %1468 = vmatmul.f32.gmra.mxu0 %v1153
    %v1469 = vpop.f32.mrf.mxu0
    %v1470 = vadd.f32 %v1450, %v1469
    %1471 = vdwg.mxu0
    %v1472 = vld [vmem:[%s3 + $0x3] sm:$0x1]
    %v1473 = vperm.slane %v1472, 0
    %v1474 = vadd.f32 %v1470, %v1473
    %v1475 = vmax.f32 %v1474, 0.0
    %1476 = vrot.lane.b32.xlu0 %v818, 64
    %v1477 = vpop.permute.xlu0 %1476
    %v1479 = vsel %vm794, %v1475, %v1477
    %v1480 = vld [vmem:[%s2 + $0x8c0] sm:$0xff]
    %v1481 = vld [vmem:[%s2 + $0x8c8] sm:$0xff]
    %v1482 = vld [vmem:[%s2 + $0x8d0] sm:$0xff]
    %v1483 = vld [vmem:[%s2 + $0x8d8] sm:$0xff]
    %v1484 = vld [vmem:[%s2 + $0x8e0] sm:$0xff]
    %v1485 = vld [vmem:[%s2 + $0x8e8] sm:$0xff]
    %v1486 = vld [vmem:[%s2 + $0x8f0] sm:$0xff]
    %v1487 = vld [vmem:[%s2 + $0x8f8] sm:$0xff]
    %v1488 = vld [vmem:[%s2 + $0x900] sm:$0xff]
    %v1489 = vld [vmem:[%s2 + $0x908] sm:$0xff]
    %v1490 = vld [vmem:[%s2 + $0x910] sm:$0xff]
    %v1491 = vld [vmem:[%s2 + $0x918] sm:$0xff]
    %v1492 = vld [vmem:[%s2 + $0x920] sm:$0xff]
    %v1493 = vld [vmem:[%s2 + $0x928] sm:$0xff]
    %v1494 = vld [vmem:[%s2 + $0x930] sm:$0xff]
    %v1495 = vld [vmem:[%s2 + $0x938] sm:$0xff]
    %v1496 = vld [vmem:[%s3 + $0x4] sm:$0x1]
    %v1497 = vperm.slane %v1496, 0
    %1498 = vmatpush.msra.mxu0 %v1495
    %1499 = vmatpush.msra.mxu0 %v1494
    %1500 = vmatpush.msra.mxu0 %v1493
    %1501 = vmatpush.msra.mxu0 %v1492
    %1502 = vmatpush.msra.mxu0 %v1491
    %1503 = vmatpush.msra.mxu0 %v1490
    %1504 = vmatpush.msra.mxu0 %v1489
    %1505 = vmatpush.msra.mxu0 %v1488
    %1506 = vmatpush.msra.mxu0 %v1487
    %1507 = vmatpush.msra.mxu0 %v1486
    %1508 = vmatpush.msra.mxu0 %v1485
    %1509 = vmatpush.msra.mxu0 %v1484
    %1510 = vmatpush.msra.mxu0 %v1483
    %1511 = vmatpush.msra.mxu0 %v1482
    %1512 = vmatpush.msra.mxu0 %v1481
    %1513 = vmatpush.msra.mxu0 %v1480
    %1514 = vmatmul.f32.gmra.mxu0 %v1479
    %v1515 = vpop.f32.mrf.mxu0
    %v1516 = vadd.f32 %v1497, %v1515
    %1517 = vdwg.mxu0
    %v1518 = vmax.f32 %v1516, 0.0
    %1519 = vst.msk [vmem:[#allocation2] sm:$0xff] %vm794, %v1518
    // Predicated region
    $region22: #{tpu_custom_call.1} parent=1 // pred_check
      _
    $region23: #{tpu_custom_call.1} parent=1 // pred_check_branch
      %1521 = sbr.rel (0) target = $region25
    $region24: #{tpu_custom_call.1} parent=1 // pred_region
      %1523 = vsyncadd [#allocation3], 0
      %s1525 = sshll.u32 [#allocation2], 4
      %s1526 = int_to_ptr.vmem [resolvable:$true] %s1525
      %s1527 = sshll.u32 %s5, 4
      %s1528 = int_to_ptr.hbm [resolvable:$true] %s1527
      %1530 = dma.vmem_to_hbm [thread:$0]  %s1526, 128, %s1528, [#allocation3]
    $region25: #{tpu_custom_call.1} parent=1 // pred_fallthru
      _
    // Predicated region
    $region26: #{tpu_custom_call.1} parent=1 // pred_check
      _
    $region27: #{tpu_custom_call.1} parent=1 // pred_check_branch
      %1532 = sbr.rel (0) target = $region29
    $region28: #{tpu_custom_call.1} parent=1 // pred_region
      %1534 = dma.done [#allocation3], 128
    $region29: #{tpu_custom_call.1} parent=1 // pred_fallthru
      _
    %1535 = vsyncpa [#allocation3], 1

</llo_original>
